<compile_context>
chip_gen: v5e
topology: v5e:2x2
jax: 0.10.0
libtpu: 0.0.40
codegen_flags: <defaults>
</compile_context>

<pallas_src>
from typing import NamedTuple

import jax
import jax.numpy as jnp
from jax.experimental import pallas as pl
from jax.experimental.pallas import tpu as pltpu


def _round_up(n: int, m: int) -> int:
    return ((n + m - 1) // m) * m


def _vmem_budget_bytes() -> int:
    """Per-generation VMEM budget with headroom for Mosaic internals."""
    try:
        phys = int(pltpu.get_tpu_info().vmem_capacity_bytes)
    except Exception:
        phys = 64 << 20          # conservative (v7x per-TC VMEM)
    return int(min(phys - (8 << 20), 100 << 20))   # ~56 MiB v7x, ~100 MiB v5e/v6e


def _pick_batch_tile(B: int, block_batch: int):
    """Largest 8-aligned batch tile with <=~12.5% padding waste.

    Prefers >= 2 grid steps when the batch allows it so v7x's two TensorCores
    both get work under dimension_semantics=("parallel", ...).
    """
    B8 = _round_up(B, 8)
    cap = min(_round_up(max(block_batch, 8), 8), B8)
    if B8 >= 16:
        cap = min(cap, _round_up(B8 // 2, 8))
    tb = 8
    for cand in range(16, cap + 1, 8):
        if _round_up(B8, cand) * 8 <= B8 * 9:     # padded rows <= 12.5%
            tb = cand
    return tb, _round_up(B8, tb)


def _pick_d_tile(Dp: int, desired: int) -> int:
    """Largest multiple-of-128 divisor of Dp that is <= desired."""
    desired = max(128, min(_round_up(desired, 128), Dp))
    for td in range(desired, 127, -128):
        if Dp % td == 0:
            return td
    return 128


# -----------------------------------------------------------------------------
# Kernels
# -----------------------------------------------------------------------------

def _fused_kernel(x_ref, w1_ref, b1_ref, w2_ref, b2_ref, o_ref):
    """Whole decoder resident: matmul -> bias -> ReLU -> matmul -> bias.

    x_ref:  [TB, Dp] (input dtype)      w1_ref: [Dp, Hp] (compute dtype)
    b1_ref: [1, Hp]  f32                w2_ref: [Hp, Dp] (compute dtype)
    b2_ref: [1, Dp]  f32                o_ref:  [TB, Dp] (output dtype)
    """
    x = x_ref[...].astype(w1_ref.dtype)           # cast in-kernel (VPU filler)
    h = jnp.dot(x, w1_ref[...], preferred_element_type=jnp.float32)
    h = jnp.maximum(h + b1_ref[...], 0.0)         # f32 bias + ReLU
    y = jnp.dot(h.astype(w2_ref.dtype), w2_ref[...],
                preferred_element_type=jnp.float32)
    o_ref[...] = (y + b2_ref[...]).astype(o_ref.dtype)


def _dtiled_kernel(x_ref, w1_ref, b1_ref, w2_ref, b2_ref, o_ref, h_ref):
    """Decoder-column-tiled variant for large D.

    Grid = (batch tiles, decoder column tiles).  The hidden activations for
    the current batch tile are computed once (at j == 0) into the VMEM scratch
    h_ref and reused for every w2 column slab.
    """
    @pl.when(pl.program_id(1) == 0)
    def _():
        x = x_ref[...].astype(w1_ref.dtype)
        h = jnp.dot(x, w1_ref[...], preferred_element_type=jnp.float32)
        h_ref[...] = jnp.maximum(h + b1_ref[...], 0.0)

    y = jnp.dot(h_ref[...].astype(w2_ref.dtype), w2_ref[...],
                preferred_element_type=jnp.float32)
    o_ref[...] = (y + b2_ref[...]).astype(o_ref.dtype)


# -----------------------------------------------------------------------------
# Parameter preparation (hoisted out of the per-call path)
# -----------------------------------------------------------------------------

class AEParams(NamedTuple):
    w1: jax.Array   # [Dp, Hp] compute dtype
    b1: jax.Array   # [1, Hp]  f32
    w2: jax.Array   # [Hp, Dp] compute dtype
    b2: jax.Array   # [1, Dp]  f32
    D: int
    Hd: int
    Dp: int
    Hp: int


def prepare_params(w1, b1, w2, b2, *, compute_dtype=jnp.bfloat16) -> AEParams:
    """Pad/cast the weights once per weight set (lane-dense, 128-aligned)."""
    D, Hd = w1.shape
    assert w2.shape == (Hd, D) and b1.shape == (Hd,) and b2.shape == (D,)
    Dp = _round_up(D, 128)
    Hp = _round_up(max(Hd, 128), 128)
    w1_p = jnp.pad(w1.astype(compute_dtype), ((0, Dp - D), (0, Hp - Hd)))
    w2_p = jnp.pad(w2.astype(compute_dtype), ((0, Hp - Hd), (0, Dp - D)))
    b1_p = jnp.pad(b1.astype(jnp.float32), (0, Hp - Hd)).reshape(1, Hp)
    b2_p = jnp.pad(b2.astype(jnp.float32), (0, Dp - D)).reshape(1, Dp)
    return AEParams(w1_p, b1_p, w2_p, b2_p, D, Hd, Dp, Hp)


# -----------------------------------------------------------------------------
# Forward
# -----------------------------------------------------------------------------

def autoencoder_forward(x_nchw, params: AEParams, *,
                        block_batch: int = 512, block_d=None):
    """x_nchw: [B, C, H, W]. Returns the reconstruction with the same shape."""
    B, C, H, W = x_nchw.shape
    D = C * H * W
    assert D == params.D, f"feature dim mismatch: {D} vs {params.D}"
    Dp, Hp = params.Dp, params.Hp

    out_dtype = x_nchw.dtype
    c_bytes = jnp.dtype(params.w1.dtype).itemsize
    x_bytes = jnp.dtype(x_nchw.dtype).itemsize
    o_bytes = jnp.dtype(out_dtype).itemsize

    budget = _vmem_budget_bytes()

    # Choose between the fully-resident decoder and the D-tiled decoder.
    full_w_bytes = 2 * Dp * Hp * c_bytes + (Hp + Dp) * 4
    d_tiled = (block_d is not None) or (full_w_bytes > (3 * budget) // 4)

    if d_tiled:
        TD = _pick_d_tile(Dp, 512 if block_d is None else int(block_d))
        # w1/b1 single-buffered residents; w2/b2 double-buffered column slabs.
        resident = Dp * Hp * c_bytes + Hp * 4 + 2 * (Hp * TD * c_bytes + TD * 4)
        per_row = 2 * Dp * x_bytes + 2 * TD * o_bytes + Hp * 4
    else:
        TD = Dp
        resident = full_w_bytes
        per_row = 2 * Dp * (x_bytes + o_bytes) + Hp * 4

    # Batch tile: large (amortize per-step overhead, fill the MXU), but
    # clamped by the VMEM budget and by the padding-waste rule.
    tb, Bp = _pick_batch_tile(B, block_batch)
    max_tb = max(8, ((budget - resident) // max(per_row, 1)) // 8 * 8)
    if tb > max_tb:
        tb = max_tb
        Bp = _round_up(_round_up(B, 8), tb)
    n_b = Bp // tb

    # Generous VMEM request, but never the whole chip (headroom for Mosaic).
    need = resident + tb * per_row
    vmem_limit = int(min(budget, max(3 * need + (16 << 20), 32 << 20)))

    # Pad x only when actually required (avoids an extra HBM pass over x).
    x_flat = x_nchw.reshape(B, D)
    if Bp != B or Dp != D:
        x_flat = jnp.pad(x_flat, ((0, Bp - B), (0, Dp - D)))

    w_traffic = Dp * Hp * c_bytes * (1 + (n_b if d_tiled else 1))
    cost = pl.CostEstimate(
        flops=4 * Bp * Dp * Hp,                    # two matmuls
        transcendentals=0,
        bytes_accessed=Bp * Dp * (x_bytes + o_bytes) + w_traffic + (Hp + Dp) * 4,
    )

    def call(single_buffer_weights: bool):
        # Constant-index operands need no pipelining; single-buffer them.
        res = (dict(pipeline_mode=pl.Buffered(1))
               if single_buffer_weights else {})
        if not d_tiled:
            return pl.pallas_call(
                _fused_kernel,
                out_shape=jax.ShapeDtypeStruct((Bp, Dp), out_dtype),
                grid=(n_b,),
                in_specs=[
                    pl.BlockSpec((tb, Dp), lambda i: (i, 0)),          # x
                    pl.BlockSpec((Dp, Hp), lambda i: (0, 0), **res),   # w1
                    pl.BlockSpec((1, Hp), lambda i: (0, 0), **res),    # b1
                    pl.BlockSpec((Hp, Dp), lambda i: (0, 0), **res),   # w2
                    pl.BlockSpec((1, Dp), lambda i: (0, 0), **res),    # b2
                ],
                out_specs=pl.BlockSpec((tb, Dp), lambda i: (i, 0)),
                compiler_params=pltpu.CompilerParams(
                    dimension_semantics=("parallel",),
                    vmem_limit_bytes=vmem_limit,
                ),
                cost_estimate=cost,
            )(x_flat, params.w1, params.b1, params.w2, params.b2)
        else:
            return pl.pallas_call(
                _dtiled_kernel,
                out_shape=jax.ShapeDtypeStruct((Bp, Dp), out_dtype),
                grid=(n_b, Dp // TD),
                in_specs=[
                    pl.BlockSpec((tb, Dp), lambda i, j: (i, 0)),           # x
                    pl.BlockSpec((Dp, Hp), lambda i, j: (0, 0), **res),    # w1
                    pl.BlockSpec((1, Hp), lambda i, j: (0, 0), **res),     # b1
                    pl.BlockSpec((Hp, TD), lambda i, j: (0, j)),           # w2 slab
                    pl.BlockSpec((1, TD), lambda i, j: (0, j)),            # b2 slab
                ],
                out_specs=pl.BlockSpec((tb, TD), lambda i, j: (i, j)),
                scratch_shapes=[pltpu.VMEM((tb, Hp), jnp.float32)],
                compiler_params=pltpu.CompilerParams(
                    dimension_semantics=("parallel", "arbitrary"),
                    vmem_limit_bytes=vmem_limit,
                ),
                cost_estimate=cost,
            )(x_flat, params.w1, params.b1, params.w2, params.b2)

    try:
        out_flat = call(True)
    except Exception:
        # Fallback for Pallas versions that reject single-buffer pipeline_mode.
        out_flat = call(False)

    if Bp != B or Dp != D:
        out_flat = out_flat[:B, :D]
    return out_flat.reshape(B, C, H, W)


def reference_forward(x_nchw, w1, b1, w2, b2):
    """Pure-JAX reference mirroring the PyTorch semantics."""
    B = x_nchw.shape[0]
    x = x_nchw.reshape(B, -1)
    h = jnp.maximum(x @ w1 + b1, 0.0)
    y = h @ w2 + b2
    return y.reshape(x_nchw.shape)


if __name__ == "__main__":
    key = jax.random.PRNGKey(0)
    k_x, k_w1, k_b1, k_w2, k_b2, k_xb = jax.random.split(key, 6)

    # Small shapes: batch=2, channels=4, spatial=16, hidden=32
    B, C, H, W = 2, 4, 16, 16
    D = C * H * W          # 1024
    Hd = 32

    x = jax.random.normal(k_x, (B, C, H, W), dtype=jnp.float32)
    w1 = jax.random.normal(k_w1, (D, Hd), dtype=jnp.float32) * (1.0 / D) ** 0.5
    b1 = jax.random.normal(k_b1, (Hd,), dtype=jnp.float32) * 0.01
    w2 = jax.random.normal(k_w2, (Hd, D), dtype=jnp.float32) * (1.0 / Hd) ** 0.5
    b2 = jax.random.normal(k_b2, (D,), dtype=jnp.float32) * 0.01

    ref = reference_forward(x, w1, b1, w2, b2)

    # 1) Exact path: f32 MXU inputs -> tight tolerance.
    p_f32 = prepare_params(w1, b1, w2, b2, compute_dtype=jnp.float32)
    out = autoencoder_forward(x, p_f32)
    jax.block_until_ready(out)
    assert out.shape == x.shape, f"shape mismatch: {out.shape} vs {x.shape}"
    assert jnp.allclose(out, ref, atol=1e-4, rtol=1e-4), "f32 path mismatch"

    # 2) Default bf16 MXU path (f32 accumulation / bias / ReLU).
    p_bf16 = prepare_params(w1, b1, w2, b2)   # compute_dtype=bf16 by default
    out_bf16 = autoencoder_forward(x, p_bf16)
    jax.block_until_ready(out_bf16)
    assert jnp.allclose(out_bf16, ref, atol=5e-2, rtol=5e-2), "bf16 path mismatch"

    # 3) Decoder column-tiled path (large-D code path), forced via block_d.
    out_dt = autoencoder_forward(x, p_f32, block_d=256)
    jax.block_until_ready(out_dt)
    assert jnp.allclose(out_dt, ref, atol=1e-4, rtol=1e-4), "D-tiled path mismatch"

    # 4) Multi-batch-tile / ragged-batch path (B=20 -> several 8-row tiles).
    xb = jax.random.normal(k_xb, (20, C, H, W), dtype=jnp.float32)
    refb = reference_forward(xb, w1, b1, w2, b2)
    outb = autoencoder_forward(xb, p_f32)
    jax.block_until_ready(outb)
    assert jnp.allclose(outb, refb, atol=1e-4, rtol=1e-4), "ragged batch mismatch"

    print("KERNEL_OK")
</pallas_src>

<mosaic_0001>
module attributes {stable_mosaic.version = 11 : i64} {
  func.func @_fused_kernel(%arg0: i32, %arg1: memref<8x1024xf32, #tpu.memory_space<vmem>>, %arg2: memref<1024x128xf32, #tpu.memory_space<vmem>>, %arg3: memref<1x128xf32, #tpu.memory_space<vmem>>, %arg4: memref<128x1024xf32, #tpu.memory_space<vmem>>, %arg5: memref<1x1024xf32, #tpu.memory_space<vmem>>, %arg6: memref<8x1024xf32, #tpu.memory_space<vmem>>) attributes {dimension_semantics = [#tpu.dimension_semantics<parallel>], iteration_bounds = array<i64: 1>, scalar_prefetch = 0 : i64, scratch_operands = 0 : i64, tpu.core_type = #tpu.core_type<tc>, window_params = [{transform_indices = @transform_0, window_bounds = array<i64: 8, 1024>}, {pipeline_mode = #tpu.pipeline_mode<synchronous>, transform_indices = @transform_1, window_bounds = array<i64: 1024, 128>}, {pipeline_mode = #tpu.pipeline_mode<synchronous>, transform_indices = @transform_2, window_bounds = array<i64: 1, 128>}, {pipeline_mode = #tpu.pipeline_mode<synchronous>, transform_indices = @transform_3, window_bounds = array<i64: 128, 1024>}, {pipeline_mode = #tpu.pipeline_mode<synchronous>, transform_indices = @transform_4, window_bounds = array<i64: 1, 1024>}, {transform_indices = @transform_5, window_bounds = array<i64: 8, 1024>}]} {
    %c0 = arith.constant 0 : index
    %c0_0 = arith.constant 0 : index
    %0 = vector.load %arg1[%c0, %c0_0] : memref<8x1024xf32, #tpu.memory_space<vmem>>, vector<8x1024xf32>
    %c0_1 = arith.constant 0 : index
    %c0_2 = arith.constant 0 : index
    %1 = vector.load %arg2[%c0_1, %c0_2] : memref<1024x128xf32, #tpu.memory_space<vmem>>, vector<1024x128xf32>
    %cst = arith.constant dense<0.000000e+00> : vector<8x128xf32>
    %2 = tpu.matmul %0, %1, %cst {dimension_numbers = #tpu.dot_dimension_numbers<[1], [0], [0], [1], [0, 0, 1, 1], [], []>} : vector<8x1024xf32>, vector<1024x128xf32>, vector<8x128xf32> -> vector<8x128xf32>
    %c0_3 = arith.constant 0 : index
    %c0_4 = arith.constant 0 : index
    %3 = vector.load %arg3[%c0_3, %c0_4] : memref<1x128xf32, #tpu.memory_space<vmem>>, vector<1x128xf32>
    %4 = vector.broadcast %3 : vector<1x128xf32> to vector<8x128xf32>
    %5 = arith.addf %2, %4 : vector<8x128xf32>
    %cst_5 = arith.constant 0.000000e+00 : f32
    %6 = vector.broadcast %cst_5 : f32 to vector<8x128xf32>
    %7 = arith.maximumf %5, %6 : vector<8x128xf32>
    %c0_6 = arith.constant 0 : index
    %c0_7 = arith.constant 0 : index
    %8 = vector.load %arg4[%c0_6, %c0_7] : memref<128x1024xf32, #tpu.memory_space<vmem>>, vector<128x1024xf32>
    %cst_8 = arith.constant dense<0.000000e+00> : vector<8x1024xf32>
    %9 = tpu.matmul %7, %8, %cst_8 {dimension_numbers = #tpu.dot_dimension_numbers<[1], [0], [0], [1], [0, 0, 1, 1], [], []>} : vector<8x128xf32>, vector<128x1024xf32>, vector<8x1024xf32> -> vector<8x1024xf32>
    %c0_9 = arith.constant 0 : index
    %c0_10 = arith.constant 0 : index
    %10 = vector.load %arg5[%c0_9, %c0_10] : memref<1x1024xf32, #tpu.memory_space<vmem>>, vector<1x1024xf32>
    %11 = vector.broadcast %10 : vector<1x1024xf32> to vector<8x1024xf32>
    %12 = arith.addf %9, %11 : vector<8x1024xf32>
    %c0_11 = arith.constant 0 : index
    %c0_12 = arith.constant 0 : index
    %13 = vector.load %arg6[%c0_11, %c0_12] : memref<8x1024xf32, #tpu.memory_space<vmem>>, vector<8x1024xf32>
    tpu.vector_store %arg6[%c0_11, %c0_12], %12 {strides = array<i32>} : memref<8x1024xf32, #tpu.memory_space<vmem>>, vector<8x1024xf32>,
    return
  }
  func.func @transform_0(%arg0: i32) -> (i32, i32) {
    %c0_i32 = arith.constant 0 : i32
    %c0_i32_0 = arith.constant 0 : i32
    return %arg0, %c0_i32 : i32, i32
  }
  func.func @transform_1(%arg0: i32) -> (i32, i32) {
    %c0_i32 = arith.constant 0 : i32
    %c0_i32_0 = arith.constant 0 : i32
    %c0_i32_1 = arith.constant 0 : i32
    return %c0_i32, %c0_i32_0 : i32, i32
  }
  func.func @transform_2(%arg0: i32) -> (i32, i32) {
    %c0_i32 = arith.constant 0 : i32
    %c0_i32_0 = arith.constant 0 : i32
    %c0_i32_1 = arith.constant 0 : i32
    return %c0_i32, %c0_i32_0 : i32, i32
  }
  func.func @transform_3(%arg0: i32) -> (i32, i32) {
    %c0_i32 = arith.constant 0 : i32
    %c0_i32_0 = arith.constant 0 : i32
    %c0_i32_1 = arith.constant 0 : i32
    return %c0_i32, %c0_i32_0 : i32, i32
  }
  func.func @transform_4(%arg0: i32) -> (i32, i32) {
    %c0_i32 = arith.constant 0 : i32
    %c0_i32_0 = arith.constant 0 : i32
    %c0_i32_1 = arith.constant 0 : i32
    return %c0_i32, %c0_i32_0 : i32, i32
  }
  func.func @transform_5(%arg0: i32) -> (i32, i32) {
    %c0_i32 = arith.constant 0 : i32
    %c0_i32_0 = arith.constant 0 : i32
    return %arg0, %c0_i32 : i32, i32
  }
}

module attributes {stable_mosaic.version = 11 : i64} {
  func.func @_fused_kernel(%arg0: i32, %arg1: memref<8x1024xf32, #tpu.memory_space<vmem>>, %arg2: memref<1024x128xf32, #tpu.memory_space<vmem>>, %arg3: memref<1x128xf32, #tpu.memory_space<vmem>>, %arg4: memref<128x1024xf32, #tpu.memory_space<vmem>>, %arg5: memref<1x1024xf32, #tpu.memory_space<vmem>>, %arg6: memref<8x1024xf32, #tpu.memory_space<vmem>>) attributes {dimension_semantics = [#tpu.dimension_semantics<parallel>], iteration_bounds = array<i64: 1>, scalar_prefetch = 0 : i64, scratch_operands = 0 : i64, tpu.core_type = #tpu.core_type<tc>, window_params = [{transform_indices = @transform_0, window_bounds = array<i64: 8, 1024>}, {pipeline_mode = #tpu.pipeline_mode<synchronous>, transform_indices = @transform_1, window_bounds = array<i64: 1024, 128>}, {pipeline_mode = #tpu.pipeline_mode<synchronous>, transform_indices = @transform_2, window_bounds = array<i64: 1, 128>}, {pipeline_mode = #tpu.pipeline_mode<synchronous>, transform_indices = @transform_3, window_bounds = array<i64: 128, 1024>}, {pipeline_mode = #tpu.pipeline_mode<synchronous>, transform_indices = @transform_4, window_bounds = array<i64: 1, 1024>}, {transform_indices = @transform_5, window_bounds = array<i64: 8, 1024>}]} {
    %c0 = arith.constant 0 : index
    %c0_0 = arith.constant 0 : index
    %0 = vector.load %arg1[%c0, %c0_0] : memref<8x1024xf32, #tpu.memory_space<vmem>>, vector<8x1024xf32>
    %c0_1 = arith.constant 0 : index
    %c0_2 = arith.constant 0 : index
    %1 = vector.load %arg2[%c0_1, %c0_2] : memref<1024x128xf32, #tpu.memory_space<vmem>>, vector<1024x128xf32>
    %cst = arith.constant dense<0.000000e+00> : vector<8x128xf32>
    %2 = tpu.matmul %0, %1, %cst {dimension_numbers = #tpu.dot_dimension_numbers<[1], [0], [0], [1], [0, 0, 1, 1], [], []>} : vector<8x1024xf32>, vector<1024x128xf32>, vector<8x128xf32> -> vector<8x128xf32>
    %c0_3 = arith.constant 0 : index
    %c0_4 = arith.constant 0 : index
    %3 = vector.load %arg3[%c0_3, %c0_4] : memref<1x128xf32, #tpu.memory_space<vmem>>, vector<1x128xf32>
    %4 = vector.broadcast %3 : vector<1x128xf32> to vector<8x128xf32>
    %5 = arith.addf %2, %4 : vector<8x128xf32>
    %cst_5 = arith.constant 0.000000e+00 : f32
    %6 = vector.broadcast %cst_5 : f32 to vector<8x128xf32>
    %7 = arith.maximumf %5, %6 : vector<8x128xf32>
    %c0_6 = arith.constant 0 : index
    %c0_7 = arith.constant 0 : index
    %8 = vector.load %arg4[%c0_6, %c0_7] : memref<128x1024xf32, #tpu.memory_space<vmem>>, vector<128x1024xf32>
    %cst_8 = arith.constant dense<0.000000e+00> : vector<8x1024xf32>
    %9 = tpu.matmul %7, %8, %cst_8 {dimension_numbers = #tpu.dot_dimension_numbers<[1], [0], [0], [1], [0, 0, 1, 1], [], []>} : vector<8x128xf32>, vector<128x1024xf32>, vector<8x1024xf32> -> vector<8x1024xf32>
    %c0_9 = arith.constant 0 : index
    %c0_10 = arith.constant 0 : index
    %10 = vector.load %arg5[%c0_9, %c0_10] : memref<1x1024xf32, #tpu.memory_space<vmem>>, vector<1x1024xf32>
    %11 = vector.broadcast %10 : vector<1x1024xf32> to vector<8x1024xf32>
    %12 = arith.addf %9, %11 : vector<8x1024xf32>
    %c0_11 = arith.constant 0 : index
    %c0_12 = arith.constant 0 : index
    %13 = vector.load %arg6[%c0_11, %c0_12] : memref<8x1024xf32, #tpu.memory_space<vmem>>, vector<8x1024xf32>
    tpu.vector_store %arg6[%c0_11, %c0_12], %12 {strides = array<i32>} : memref<8x1024xf32, #tpu.memory_space<vmem>>, vector<8x1024xf32>,
    return
  }
  func.func @transform_0(%arg0: i32) -> (i32, i32) {
    %c0_i32 = arith.constant 0 : i32
    %c0_i32_0 = arith.constant 0 : i32
    return %arg0, %c0_i32 : i32, i32
  }
  func.func @transform_1(%arg0: i32) -> (i32, i32) {
    %c0_i32 = arith.constant 0 : i32
    %c0_i32_0 = arith.constant 0 : i32
    %c0_i32_1 = arith.constant 0 : i32
    return %c0_i32, %c0_i32_0 : i32, i32
  }
  func.func @transform_2(%arg0: i32) -> (i32, i32) {
    %c0_i32 = arith.constant 0 : i32
    %c0_i32_0 = arith.constant 0 : i32
    %c0_i32_1 = arith.constant 0 : i32
    return %c0_i32, %c0_i32_0 : i32, i32
  }
  func.func @transform_3(%arg0: i32) -> (i32, i32) {
    %c0_i32 = arith.constant 0 : i32
    %c0_i32_0 = arith.constant 0 : i32
    %c0_i32_1 = arith.constant 0 : i32
    return %c0_i32, %c0_i32_0 : i32, i32
  }
  func.func @transform_4(%arg0: i32) -> (i32, i32) {
    %c0_i32 = arith.constant 0 : i32
    %c0_i32_0 = arith.constant 0 : i32
    %c0_i32_1 = arith.constant 0 : i32
    return %c0_i32, %c0_i32_0 : i32, i32
  }
  func.func @transform_5(%arg0: i32) -> (i32, i32) {
    %c0_i32 = arith.constant 0 : i32
    %c0_i32_0 = arith.constant 0 : i32
    return %arg0, %c0_i32 : i32, i32
  }
}

</mosaic_0001>

<llo_original>
// kernel: tpu_custom_call.1
$region0: #{tpu_custom_call.1}
  #allocation0 [shape = 'u32[]', space=smem, size = 0x4, offset = 0x4, fixed_abs, tag = 'smem constant byte address 0x4 - core index']
  #allocation1 [shape = 'u32[72,128]{1,0:T(1,128)}', space=vmem, size = 0x9000, scoped, tag = 'internal scratch']
  %s0 = inlined_call_operand.hbm [shape: f32[8,1024], index: 0, kind: input, shape index: {}]
  %s1 = inlined_call_operand.hbm [shape: f32[1024,128], index: 1, kind: input, shape index: {}]
  %s2 = inlined_call_operand.vmem [shape: f32[1,128], index: 2, kind: input, shape index: {}]
  %s3 = inlined_call_operand.hbm [shape: f32[128,1024], index: 3, kind: input, shape index: {}]
  %s4 = inlined_call_operand.hbm [shape: f32[1,1024], index: 4, kind: input, shape index: {}]
  %s5 = inlined_call_operand.hbm [shape: f32[8,1024], index: 5, kind: output, shape index: {}]
  %s6 = sld [smem:[#allocation0]]
  $region46: #{tpu_custom_call.1} parent=0
    _
  %s8 = ssub.s32 1, %s6
  %s9 = scalar_select 0, %s8, %s6
  $region1: #{tpu_custom_call.1} parent=0
    #allocation2 [shape = 'u8[32768]{0}', space=vmem, size = 0x8000, scoped, tag = 'input window, operand 0, single buffered']
    #allocation3 [shape = 's32[1]{0}', space=sflag, size = 0x4, scoped, tag = 'scoped memory for tpu_custom_call.1']
    #allocation4 [shape = 's32[1]{0}', space=sflag, size = 0x4, scoped, tag = 'scoped memory for tpu_custom_call.1']
    #allocation5 [shape = 'u8[524288]{0}', space=vmem, size = 0x80000, scoped, tag = 'input window, operand 1, single buffered']
    #allocation6 [shape = 's32[1]{0}', space=sflag, size = 0x4, scoped, tag = 'scoped memory for tpu_custom_call.1']
    #allocation7 [shape = 'u8[524288]{0}', space=vmem, size = 0x80000, scoped, tag = 'input window, operand 3, single buffered']
    #allocation8 [shape = 'u8[4096]{0}', space=vmem, size = 0x1000, scoped, tag = 'input window, operand 4, single buffered']
    #allocation9 [shape = 's32[1]{0}', space=sflag, size = 0x4, scoped, tag = 'scoped memory for tpu_custom_call.1']
    #allocation10 [shape = 'u8[32768]{0}', space=vmem, size = 0x8000, scoped, tag = 'output window, operand 0, single buffered']
    %10 = vsyncpa [#allocation3], 0
    %11 = vsyncpa [#allocation6], 0
    %12 = vsyncpa [#allocation9], 0
    %13 = vsyncpa [#allocation4], 0
    // Predicated region
    $region2: #{tpu_custom_call.1} parent=1 // pred_check
      _
    $region3: #{tpu_custom_call.1} parent=1 // pred_check_branch
      %15 = sbr.rel (0) target = $region5
    $region4: #{tpu_custom_call.1} parent=1 // pred_region
      %17 = vsyncadd [#allocation3], 0
      %s19 = sshll.u32 %s0, 4
      %s20 = int_to_ptr.hbm [resolvable:$true] %s19
      %s21 = sshll.u32 [#allocation2], 4
      %s22 = int_to_ptr.vmem [resolvable:$true] %s21
      %24 = dma.hbm_to_vmem [thread:$0]  %s20, 1024, %s22, [#allocation3]
    $region5: #{tpu_custom_call.1} parent=1 // pred_fallthru
      _
    // Predicated region
    $region6: #{tpu_custom_call.1} parent=1 // pred_check
      _
    $region7: #{tpu_custom_call.1} parent=1 // pred_check_branch
      %26 = sbr.rel (0) target = $region9
    $region8: #{tpu_custom_call.1} parent=1 // pred_region
      %28 = vsyncadd [#allocation6], 0
      %s29 = sshll.u32 %s1, 4
      %s30 = int_to_ptr.hbm [resolvable:$true] %s29
      %s31 = sshll.u32 [#allocation5], 4
      %s32 = int_to_ptr.vmem [resolvable:$true] %s31
      %37 = dma.hbm_to_vmem [thread:$0]  %s30, 16384, %s32, [#allocation6], 128, 128, 8
    $region9: #{tpu_custom_call.1} parent=1 // pred_fallthru
      _
    // Predicated region
    $region10: #{tpu_custom_call.1} parent=1 // pred_check
      _
    $region11: #{tpu_custom_call.1} parent=1 // pred_check_branch
      %39 = sbr.rel (0) target = $region13
    $region12: #{tpu_custom_call.1} parent=1 // pred_region
      _
    $region13: #{tpu_custom_call.1} parent=1 // pred_fallthru
      _
    // Predicated region
    $region14: #{tpu_custom_call.1} parent=1 // pred_check
      _
    $region15: #{tpu_custom_call.1} parent=1 // pred_check_branch
      %41 = sbr.rel (0) target = $region17
    $region16: #{tpu_custom_call.1} parent=1 // pred_region
      %43 = vsyncadd [#allocation6], 0
      %s44 = sshll.u32 %s3, 4
      %s45 = int_to_ptr.hbm [resolvable:$true] %s44
      %s46 = sshll.u32 [#allocation7], 4
      %s47 = int_to_ptr.vmem [resolvable:$true] %s46
      %52 = dma.hbm_to_vmem [thread:$0]  %s45, 16384, %s47, [#allocation6], 1024, 1024, 64
    $region17: #{tpu_custom_call.1} parent=1 // pred_fallthru
      _
    // Predicated region
    $region18: #{tpu_custom_call.1} parent=1 // pred_check
      _
    $region19: #{tpu_custom_call.1} parent=1 // pred_check_branch
      %54 = sbr.rel (0) target = $region21
    $region20: #{tpu_custom_call.1} parent=1 // pred_region
      %56 = vsyncadd [#allocation9], 0
      %s58 = sshll.u32 %s4, 4
      %s59 = int_to_ptr.hbm [resolvable:$true] %s58
      %s60 = sshll.u32 [#allocation8], 4
      %s61 = int_to_ptr.vmem [resolvable:$true] %s60
      %63 = dma.hbm_to_vmem [thread:$0]  %s59, 128, %s61, [#allocation9]
    $region21: #{tpu_custom_call.1} parent=1 // pred_fallthru
      _
    // Predicated region
    $region22: #{tpu_custom_call.1} parent=1 // pred_check
      _
    $region23: #{tpu_custom_call.1} parent=1 // pred_check_branch
      %65 = sbr.rel (0) target = $region25
    $region24: #{tpu_custom_call.1} parent=1 // pred_region
      %67 = dma.done [#allocation3], 1024
    $region25: #{tpu_custom_call.1} parent=1 // pred_fallthru
      _
    // Predicated region
    $region26: #{tpu_custom_call.1} parent=1 // pred_check
      _
    $region27: #{tpu_custom_call.1} parent=1 // pred_check_branch
      %69 = sbr.rel (0) target = $region29
    $region28: #{tpu_custom_call.1} parent=1 // pred_region
      %71 = dma.done [#allocation6], 16384
    $region29: #{tpu_custom_call.1} parent=1 // pred_fallthru
      _
    // Predicated region
    $region30: #{tpu_custom_call.1} parent=1 // pred_check
      _
    $region31: #{tpu_custom_call.1} parent=1 // pred_check_branch
      %73 = sbr.rel (0) target = $region33
    $region32: #{tpu_custom_call.1} parent=1 // pred_region
      %75 = dma.done [#allocation6], 16384
    $region33: #{tpu_custom_call.1} parent=1 // pred_fallthru
      _
    // Predicated region
    $region34: #{tpu_custom_call.1} parent=1 // pred_check
      _
    $region35: #{tpu_custom_call.1} parent=1 // pred_check_branch
      %77 = sbr.rel (0) target = $region37
    $region36: #{tpu_custom_call.1} parent=1 // pred_region
      %79 = dma.done [#allocation9], 128
    $region37: #{tpu_custom_call.1} parent=1 // pred_fallthru
      _
    %v80 = vld [vmem:[#allocation2] sm:$0xff]
    %v81 = vld [vmem:[#allocation2 + $0x8] sm:$0xff]
    %v82 = vld [vmem:[#allocation2 + $0x10] sm:$0xff]
    %v83 = vld [vmem:[#allocation2 + $0x18] sm:$0xff]
    %v84 = vld [vmem:[#allocation2 + $0x20] sm:$0xff]
    %v85 = vld [vmem:[#allocation2 + $0x28] sm:$0xff]
    %v86 = vld [vmem:[#allocation2 + $0x30] sm:$0xff]
    %v87 = vld [vmem:[#allocation2 + $0x38] sm:$0xff]
    %v88 = vld [vmem:[#allocation5] sm:$0xff]
    %v89 = vld [vmem:[#allocation5 + $0x8] sm:$0xff]
    %v90 = vld [vmem:[#allocation5 + $0x10] sm:$0xff]
    %v91 = vld [vmem:[#allocation5 + $0x18] sm:$0xff]
    %v92 = vld [vmem:[#allocation5 + $0x20] sm:$0xff]
    %v93 = vld [vmem:[#allocation5 + $0x28] sm:$0xff]
    %v94 = vld [vmem:[#allocation5 + $0x30] sm:$0xff]
    %v95 = vld [vmem:[#allocation5 + $0x38] sm:$0xff]
    %v96 = vld [vmem:[#allocation5 + $0x40] sm:$0xff]
    %v97 = vld [vmem:[#allocation5 + $0x48] sm:$0xff]
    %v98 = vld [vmem:[#allocation5 + $0x50] sm:$0xff]
    %v99 = vld [vmem:[#allocation5 + $0x58] sm:$0xff]
    %v100 = vld [vmem:[#allocation5 + $0x60] sm:$0xff]
    %v101 = vld [vmem:[#allocation5 + $0x68] sm:$0xff]
    %v102 = vld [vmem:[#allocation5 + $0x70] sm:$0xff]
    %v103 = vld [vmem:[#allocation5 + $0x78] sm:$0xff]
    %v104 = vld [vmem:[#allocation5 + $0x80] sm:$0xff]
    %v105 = vld [vmem:[#allocation5 + $0x88] sm:$0xff]
    %v106 = vld [vmem:[#allocation5 + $0x90] sm:$0xff]
    %v107 = vld [vmem:[#allocation5 + $0x98] sm:$0xff]
    %v108 = vld [vmem:[#allocation5 + $0xa0] sm:$0xff]
    %v109 = vld [vmem:[#allocation5 + $0xa8] sm:$0xff]
    %v110 = vld [vmem:[#allocation5 + $0xb0] sm:$0xff]
    %v111 = vld [vmem:[#allocation5 + $0xb8] sm:$0xff]
    %v112 = vld [vmem:[#allocation5 + $0xc0] sm:$0xff]
    %v113 = vld [vmem:[#allocation5 + $0xc8] sm:$0xff]
    %v114 = vld [vmem:[#allocation5 + $0xd0] sm:$0xff]
    %v115 = vld [vmem:[#allocation5 + $0xd8] sm:$0xff]
    %v116 = vld [vmem:[#allocation5 + $0xe0] sm:$0xff]
    %v117 = vld [vmem:[#allocation5 + $0xe8] sm:$0xff]
    %v118 = vld [vmem:[#allocation5 + $0xf0] sm:$0xff]
    %v119 = vld [vmem:[#allocation5 + $0xf8] sm:$0xff]
    %v120 = vld [vmem:[#allocation5 + $0x100] sm:$0xff]
    %v121 = vld [vmem:[#allocation5 + $0x108] sm:$0xff]
    %v122 = vld [vmem:[#allocation5 + $0x110] sm:$0xff]
    %v123 = vld [vmem:[#allocation5 + $0x118] sm:$0xff]
    %v124 = vld [vmem:[#allocation5 + $0x120] sm:$0xff]
    %v125 = vld [vmem:[#allocation5 + $0x128] sm:$0xff]
    %v126 = vld [vmem:[#allocation5 + $0x130] sm:$0xff]
    %v127 = vld [vmem:[#allocation5 + $0x138] sm:$0xff]
    %v128 = vld [vmem:[#allocation5 + $0x140] sm:$0xff]
    %v129 = vld [vmem:[#allocation5 + $0x148] sm:$0xff]
    %v130 = vld [vmem:[#allocation5 + $0x150] sm:$0xff]
    %v131 = vld [vmem:[#allocation5 + $0x158] sm:$0xff]
    %v132 = vld [vmem:[#allocation5 + $0x160] sm:$0xff]
    %v133 = vld [vmem:[#allocation5 + $0x168] sm:$0xff]
    %v134 = vld [vmem:[#allocation5 + $0x170] sm:$0xff]
    %v135 = vld [vmem:[#allocation5 + $0x178] sm:$0xff]
    %v136 = vld [vmem:[#allocation5 + $0x180] sm:$0xff]
    %v137 = vld [vmem:[#allocation5 + $0x188] sm:$0xff]
    %v138 = vld [vmem:[#allocation5 + $0x190] sm:$0xff]
    %v139 = vld [vmem:[#allocation5 + $0x198] sm:$0xff]
    %v140 = vld [vmem:[#allocation5 + $0x1a0] sm:$0xff]
    %v141 = vld [vmem:[#allocation5 + $0x1a8] sm:$0xff]
    %v142 = vld [vmem:[#allocation5 + $0x1b0] sm:$0xff]
    %v143 = vld [vmem:[#allocation5 + $0x1b8] sm:$0xff]
    %v144 = vld [vmem:[#allocation5 + $0x1c0] sm:$0xff]
    %v145 = vld [vmem:[#allocation5 + $0x1c8] sm:$0xff]
    %v146 = vld [vmem:[#allocation5 + $0x1d0] sm:$0xff]
    %v147 = vld [vmem:[#allocation5 + $0x1d8] sm:$0xff]
    %v148 = vld [vmem:[#allocation5 + $0x1e0] sm:$0xff]
    %v149 = vld [vmem:[#allocation5 + $0x1e8] sm:$0xff]
    %v150 = vld [vmem:[#allocation5 + $0x1f0] sm:$0xff]
    %v151 = vld [vmem:[#allocation5 + $0x1f8] sm:$0xff]
    %v152 = vld [vmem:[#allocation5 + $0x200] sm:$0xff]
    %v153 = vld [vmem:[#allocation5 + $0x208] sm:$0xff]
    %v154 = vld [vmem:[#allocation5 + $0x210] sm:$0xff]
    %v155 = vld [vmem:[#allocation5 + $0x218] sm:$0xff]
    %v156 = vld [vmem:[#allocation5 + $0x220] sm:$0xff]
    %v157 = vld [vmem:[#allocation5 + $0x228] sm:$0xff]
    %v158 = vld [vmem:[#allocation5 + $0x230] sm:$0xff]
    %v159 = vld [vmem:[#allocation5 + $0x238] sm:$0xff]
    %v160 = vld [vmem:[#allocation5 + $0x240] sm:$0xff]
    %v161 = vld [vmem:[#allocation5 + $0x248] sm:$0xff]
    %v162 = vld [vmem:[#allocation5 + $0x250] sm:$0xff]
    %v163 = vld [vmem:[#allocation5 + $0x258] sm:$0xff]
    %v164 = vld [vmem:[#allocation5 + $0x260] sm:$0xff]
    %v165 = vld [vmem:[#allocation5 + $0x268] sm:$0xff]
    %v166 = vld [vmem:[#allocation5 + $0x270] sm:$0xff]
    %v167 = vld [vmem:[#allocation5 + $0x278] sm:$0xff]
    %v168 = vld [vmem:[#allocation5 + $0x280] sm:$0xff]
    %v169 = vld [vmem:[#allocation5 + $0x288] sm:$0xff]
    %v170 = vld [vmem:[#allocation5 + $0x290] sm:$0xff]
    %v171 = vld [vmem:[#allocation5 + $0x298] sm:$0xff]
    %v172 = vld [vmem:[#allocation5 + $0x2a0] sm:$0xff]
    %v173 = vld [vmem:[#allocation5 + $0x2a8] sm:$0xff]
    %v174 = vld [vmem:[#allocation5 + $0x2b0] sm:$0xff]
    %v175 = vld [vmem:[#allocation5 + $0x2b8] sm:$0xff]
    %v176 = vld [vmem:[#allocation5 + $0x2c0] sm:$0xff]
    %v177 = vld [vmem:[#allocation5 + $0x2c8] sm:$0xff]
    %v178 = vld [vmem:[#allocation5 + $0x2d0] sm:$0xff]
    %v179 = vld [vmem:[#allocation5 + $0x2d8] sm:$0xff]
    %v180 = vld [vmem:[#allocation5 + $0x2e0] sm:$0xff]
    %v181 = vld [vmem:[#allocation5 + $0x2e8] sm:$0xff]
    %v182 = vld [vmem:[#allocation5 + $0x2f0] sm:$0xff]
    %v183 = vld [vmem:[#allocation5 + $0x2f8] sm:$0xff]
    %v184 = vld [vmem:[#allocation5 + $0x300] sm:$0xff]
    %v185 = vld [vmem:[#allocation5 + $0x308] sm:$0xff]
    %v186 = vld [vmem:[#allocation5 + $0x310] sm:$0xff]
    %v187 = vld [vmem:[#allocation5 + $0x318] sm:$0xff]
    %v188 = vld [vmem:[#allocation5 + $0x320] sm:$0xff]
    %v189 = vld [vmem:[#allocation5 + $0x328] sm:$0xff]
    %v190 = vld [vmem:[#allocation5 + $0x330] sm:$0xff]
    %v191 = vld [vmem:[#allocation5 + $0x338] sm:$0xff]
    %v192 = vld [vmem:[#allocation5 + $0x340] sm:$0xff]
    %v193 = vld [vmem:[#allocation5 + $0x348] sm:$0xff]
    %v194 = vld [vmem:[#allocation5 + $0x350] sm:$0xff]
    %v195 = vld [vmem:[#allocation5 + $0x358] sm:$0xff]
    %v196 = vld [vmem:[#allocation5 + $0x360] sm:$0xff]
    %v197 = vld [vmem:[#allocation5 + $0x368] sm:$0xff]
    %v198 = vld [vmem:[#allocation5 + $0x370] sm:$0xff]
    %v199 = vld [vmem:[#allocation5 + $0x378] sm:$0xff]
    %v200 = vld [vmem:[#allocation5 + $0x380] sm:$0xff]
    %v201 = vld [vmem:[#allocation5 + $0x388] sm:$0xff]
    %v202 = vld [vmem:[#allocation5 + $0x390] sm:$0xff]
    %v203 = vld [vmem:[#allocation5 + $0x398] sm:$0xff]
    %v204 = vld [vmem:[#allocation5 + $0x3a0] sm:$0xff]
    %v205 = vld [vmem:[#allocation5 + $0x3a8] sm:$0xff]
    %v206 = vld [vmem:[#allocation5 + $0x3b0] sm:$0xff]
    %v207 = vld [vmem:[#allocation5 + $0x3b8] sm:$0xff]
    %v208 = vld [vmem:[#allocation5 + $0x3c0] sm:$0xff]
    %v209 = vld [vmem:[#allocation5 + $0x3c8] sm:$0xff]
    %v210 = vld [vmem:[#allocation5 + $0x3d0] sm:$0xff]
    %v211 = vld [vmem:[#allocation5 + $0x3d8] sm:$0xff]
    %v212 = vld [vmem:[#allocation5 + $0x3e0] sm:$0xff]
    %v213 = vld [vmem:[#allocation5 + $0x3e8] sm:$0xff]
    %v214 = vld [vmem:[#allocation5 + $0x3f0] sm:$0xff]
    %v215 = vld [vmem:[#allocation5 + $0x3f8] sm:$0xff]
    %v216 = vld [vmem:[%s2] sm:$0x1]
    %v218 = vperm.slane %v216, 0
    %220 = vmatpush.msra.mxu0 %v103
    %221 = vmatpush.msra.mxu0 %v102
    %222 = vmatpush.msra.mxu0 %v101
    %223 = vmatpush.msra.mxu0 %v100
    %224 = vmatpush.msra.mxu0 %v99
    %225 = vmatpush.msra.mxu0 %v98
    %226 = vmatpush.msra.mxu0 %v97
    %227 = vmatpush.msra.mxu0 %v96
    %228 = vmatpush.msra.mxu0 %v95
    %229 = vmatpush.msra.mxu0 %v94
    %230 = vmatpush.msra.mxu0 %v93
    %231 = vmatpush.msra.mxu0 %v92
    %232 = vmatpush.msra.mxu0 %v91
    %233 = vmatpush.msra.mxu0 %v90
    %234 = vmatpush.msra.mxu0 %v89
    %235 = vmatpush.msra.mxu0 %v88
    %236 = vmatmul.f32.gmra.mxu0 %v80
    %v237 = vpop.f32.mrf.mxu0
    %v238 = vadd.f32 %v218, %v237
    %239 = vdwg.mxu0
    %240 = vmatpush.msra.mxu0 %v119
    %241 = vmatpush.msra.mxu0 %v118
    %242 = vmatpush.msra.mxu0 %v117
    %243 = vmatpush.msra.mxu0 %v116
    %244 = vmatpush.msra.mxu0 %v115
    %245 = vmatpush.msra.mxu0 %v114
    %246 = vmatpush.msra.mxu0 %v113
    %247 = vmatpush.msra.mxu0 %v112
    %248 = vmatpush.msra.mxu0 %v111
    %249 = vmatpush.msra.mxu0 %v110
    %250 = vmatpush.msra.mxu0 %v109
    %251 = vmatpush.msra.mxu0 %v108
    %252 = vmatpush.msra.mxu0 %v107
    %253 = vmatpush.msra.mxu0 %v106
    %254 = vmatpush.msra.mxu0 %v105
    %255 = vmatpush.msra.mxu0 %v104
    %256 = vmatmul.f32.gmra.mxu0 %v81
    %v257 = vpop.f32.mrf.mxu0
    %v258 = vadd.f32 %v238, %v257
    %259 = vdwg.mxu0
    %260 = vmatpush.msra.mxu0 %v135
    %261 = vmatpush.msra.mxu0 %v134
    %262 = vmatpush.msra.mxu0 %v133
    %263 = vmatpush.msra.mxu0 %v132
    %264 = vmatpush.msra.mxu0 %v131
    %265 = vmatpush.msra.mxu0 %v130
    %266 = vmatpush.msra.mxu0 %v129
    %267 = vmatpush.msra.mxu0 %v128
    %268 = vmatpush.msra.mxu0 %v127
    %269 = vmatpush.msra.mxu0 %v126
    %270 = vmatpush.msra.mxu0 %v125
    %271 = vmatpush.msra.mxu0 %v124
    %272 = vmatpush.msra.mxu0 %v123
    %273 = vmatpush.msra.mxu0 %v122
    %274 = vmatpush.msra.mxu0 %v121
    %275 = vmatpush.msra.mxu0 %v120
    %276 = vmatmul.f32.gmra.mxu0 %v82
    %v277 = vpop.f32.mrf.mxu0
    %v278 = vadd.f32 %v258, %v277
    %279 = vdwg.mxu0
    %280 = vmatpush.msra.mxu0 %v151
    %281 = vmatpush.msra.mxu0 %v150
    %282 = vmatpush.msra.mxu0 %v149
    %283 = vmatpush.msra.mxu0 %v148
    %284 = vmatpush.msra.mxu0 %v147
    %285 = vmatpush.msra.mxu0 %v146
    %286 = vmatpush.msra.mxu0 %v145
    %287 = vmatpush.msra.mxu0 %v144
    %288 = vmatpush.msra.mxu0 %v143
    %289 = vmatpush.msra.mxu0 %v142
    %290 = vmatpush.msra.mxu0 %v141
    %291 = vmatpush.msra.mxu0 %v140
    %292 = vmatpush.msra.mxu0 %v139
    %293 = vmatpush.msra.mxu0 %v138
    %294 = vmatpush.msra.mxu0 %v137
    %295 = vmatpush.msra.mxu0 %v136
    %296 = vmatmul.f32.gmra.mxu0 %v83
    %v297 = vpop.f32.mrf.mxu0
    %v298 = vadd.f32 %v278, %v297
    %299 = vdwg.mxu0
    %300 = vmatpush.msra.mxu0 %v167
    %301 = vmatpush.msra.mxu0 %v166
    %302 = vmatpush.msra.mxu0 %v165
    %303 = vmatpush.msra.mxu0 %v164
    %304 = vmatpush.msra.mxu0 %v163
    %305 = vmatpush.msra.mxu0 %v162
    %306 = vmatpush.msra.mxu0 %v161
    %307 = vmatpush.msra.mxu0 %v160
    %308 = vmatpush.msra.mxu0 %v159
    %309 = vmatpush.msra.mxu0 %v158
    %310 = vmatpush.msra.mxu0 %v157
    %311 = vmatpush.msra.mxu0 %v156
    %312 = vmatpush.msra.mxu0 %v155
    %313 = vmatpush.msra.mxu0 %v154
    %314 = vmatpush.msra.mxu0 %v153
    %315 = vmatpush.msra.mxu0 %v152
    %316 = vmatmul.f32.gmra.mxu0 %v84
    %v317 = vpop.f32.mrf.mxu0
    %v318 = vadd.f32 %v298, %v317
    %319 = vdwg.mxu0
    %320 = vmatpush.msra.mxu0 %v183
    %321 = vmatpush.msra.mxu0 %v182
    %322 = vmatpush.msra.mxu0 %v181
    %323 = vmatpush.msra.mxu0 %v180
    %324 = vmatpush.msra.mxu0 %v179
    %325 = vmatpush.msra.mxu0 %v178
    %326 = vmatpush.msra.mxu0 %v177
    %327 = vmatpush.msra.mxu0 %v176
    %328 = vmatpush.msra.mxu0 %v175
    %329 = vmatpush.msra.mxu0 %v174
    %330 = vmatpush.msra.mxu0 %v173
    %331 = vmatpush.msra.mxu0 %v172
    %332 = vmatpush.msra.mxu0 %v171
    %333 = vmatpush.msra.mxu0 %v170
    %334 = vmatpush.msra.mxu0 %v169
    %335 = vmatpush.msra.mxu0 %v168
    %336 = vmatmul.f32.gmra.mxu0 %v85
    %v337 = vpop.f32.mrf.mxu0
    %v338 = vadd.f32 %v318, %v337
    %339 = vdwg.mxu0
    %340 = vmatpush.msra.mxu0 %v199
    %341 = vmatpush.msra.mxu0 %v198
    %342 = vmatpush.msra.mxu0 %v197
    %343 = vmatpush.msra.mxu0 %v196
    %344 = vmatpush.msra.mxu0 %v195
    %345 = vmatpush.msra.mxu0 %v194
    %346 = vmatpush.msra.mxu0 %v193
    %347 = vmatpush.msra.mxu0 %v192
    %348 = vmatpush.msra.mxu0 %v191
    %349 = vmatpush.msra.mxu0 %v190
    %350 = vmatpush.msra.mxu0 %v189
    %351 = vmatpush.msra.mxu0 %v188
    %352 = vmatpush.msra.mxu0 %v187
    %353 = vmatpush.msra.mxu0 %v186
    %354 = vmatpush.msra.mxu0 %v185
    %355 = vmatpush.msra.mxu0 %v184
    %356 = vmatmul.f32.gmra.mxu0 %v86
    %v357 = vpop.f32.mrf.mxu0
    %v358 = vadd.f32 %v338, %v357
    %359 = vdwg.mxu0
    %360 = vmatpush.msra.mxu0 %v215
    %361 = vmatpush.msra.mxu0 %v214
    %362 = vmatpush.msra.mxu0 %v213
    %363 = vmatpush.msra.mxu0 %v212
    %364 = vmatpush.msra.mxu0 %v211
    %365 = vmatpush.msra.mxu0 %v210
    %366 = vmatpush.msra.mxu0 %v209
    %367 = vmatpush.msra.mxu0 %v208
    %368 = vmatpush.msra.mxu0 %v207
    %369 = vmatpush.msra.mxu0 %v206
    %370 = vmatpush.msra.mxu0 %v205
    %371 = vmatpush.msra.mxu0 %v204
    %372 = vmatpush.msra.mxu0 %v203
    %373 = vmatpush.msra.mxu0 %v202
    %374 = vmatpush.msra.mxu0 %v201
    %375 = vmatpush.msra.mxu0 %v200
    %376 = vmatmul.f32.gmra.mxu0 %v87
    %v377 = vpop.f32.mrf.mxu0
    %v378 = vadd.f32 %v358, %v377
    %379 = vdwg.mxu0
    %v380 = vmax.f32 %v378, 0.0
    %v381 = vld [vmem:[#allocation7] sm:$0xff]
    %v382 = vld [vmem:[#allocation7 + $0x8] sm:$0xff]
    %v383 = vld [vmem:[#allocation7 + $0x10] sm:$0xff]
    %v384 = vld [vmem:[#allocation7 + $0x18] sm:$0xff]
    %v385 = vld [vmem:[#allocation7 + $0x20] sm:$0xff]
    %v386 = vld [vmem:[#allocation7 + $0x28] sm:$0xff]
    %v387 = vld [vmem:[#allocation7 + $0x30] sm:$0xff]
    %v388 = vld [vmem:[#allocation7 + $0x38] sm:$0xff]
    %v389 = vld [vmem:[#allocation7 + $0x40] sm:$0xff]
    %v390 = vld [vmem:[#allocation7 + $0x48] sm:$0xff]
    %v391 = vld [vmem:[#allocation7 + $0x50] sm:$0xff]
    %v392 = vld [vmem:[#allocation7 + $0x58] sm:$0xff]
    %v393 = vld [vmem:[#allocation7 + $0x60] sm:$0xff]
    %v394 = vld [vmem:[#allocation7 + $0x68] sm:$0xff]
    %v395 = vld [vmem:[#allocation7 + $0x70] sm:$0xff]
    %v396 = vld [vmem:[#allocation7 + $0x78] sm:$0xff]
    %v397 = vld [vmem:[#allocation7 + $0x80] sm:$0xff]
    %v398 = vld [vmem:[#allocation7 + $0x88] sm:$0xff]
    %v399 = vld [vmem:[#allocation7 + $0x90] sm:$0xff]
    %v400 = vld [vmem:[#allocation7 + $0x98] sm:$0xff]
    %v401 = vld [vmem:[#allocation7 + $0xa0] sm:$0xff]
    %v402 = vld [vmem:[#allocation7 + $0xa8] sm:$0xff]
    %v403 = vld [vmem:[#allocation7 + $0xb0] sm:$0xff]
    %v404 = vld [vmem:[#allocation7 + $0xb8] sm:$0xff]
    %v405 = vld [vmem:[#allocation7 + $0xc0] sm:$0xff]
    %v406 = vld [vmem:[#allocation7 + $0xc8] sm:$0xff]
    %v407 = vld [vmem:[#allocation7 + $0xd0] sm:$0xff]
    %v408 = vld [vmem:[#allocation7 + $0xd8] sm:$0xff]
    %v409 = vld [vmem:[#allocation7 + $0xe0] sm:$0xff]
    %v410 = vld [vmem:[#allocation7 + $0xe8] sm:$0xff]
    %v411 = vld [vmem:[#allocation7 + $0xf0] sm:$0xff]
    %v412 = vld [vmem:[#allocation7 + $0xf8] sm:$0xff]
    %v413 = vld [vmem:[#allocation7 + $0x100] sm:$0xff]
    %v414 = vld [vmem:[#allocation7 + $0x108] sm:$0xff]
    %v415 = vld [vmem:[#allocation7 + $0x110] sm:$0xff]
    %v416 = vld [vmem:[#allocation7 + $0x118] sm:$0xff]
    %v417 = vld [vmem:[#allocation7 + $0x120] sm:$0xff]
    %v418 = vld [vmem:[#allocation7 + $0x128] sm:$0xff]
    %v419 = vld [vmem:[#allocation7 + $0x130] sm:$0xff]
    %v420 = vld [vmem:[#allocation7 + $0x138] sm:$0xff]
    %v421 = vld [vmem:[#allocation7 + $0x140] sm:$0xff]
    %v422 = vld [vmem:[#allocation7 + $0x148] sm:$0xff]
    %v423 = vld [vmem:[#allocation7 + $0x150] sm:$0xff]
    %v424 = vld [vmem:[#allocation7 + $0x158] sm:$0xff]
    %v425 = vld [vmem:[#allocation7 + $0x160] sm:$0xff]
    %v426 = vld [vmem:[#allocation7 + $0x168] sm:$0xff]
    %v427 = vld [vmem:[#allocation7 + $0x170] sm:$0xff]
    %v428 = vld [vmem:[#allocation7 + $0x178] sm:$0xff]
    %v429 = vld [vmem:[#allocation7 + $0x180] sm:$0xff]
    %v430 = vld [vmem:[#allocation7 + $0x188] sm:$0xff]
    %v431 = vld [vmem:[#allocation7 + $0x190] sm:$0xff]
    %v432 = vld [vmem:[#allocation7 + $0x198] sm:$0xff]
    %v433 = vld [vmem:[#allocation7 + $0x1a0] sm:$0xff]
    %v434 = vld [vmem:[#allocation7 + $0x1a8] sm:$0xff]
    %v435 = vld [vmem:[#allocation7 + $0x1b0] sm:$0xff]
    %v436 = vld [vmem:[#allocation7 + $0x1b8] sm:$0xff]
    %v437 = vld [vmem:[#allocation7 + $0x1c0] sm:$0xff]
    %v438 = vld [vmem:[#allocation7 + $0x1c8] sm:$0xff]
    %v439 = vld [vmem:[#allocation7 + $0x1d0] sm:$0xff]
    %v440 = vld [vmem:[#allocation7 + $0x1d8] sm:$0xff]
    %v441 = vld [vmem:[#allocation7 + $0x1e0] sm:$0xff]
    %v442 = vld [vmem:[#allocation7 + $0x1e8] sm:$0xff]
    %v443 = vld [vmem:[#allocation7 + $0x1f0] sm:$0xff]
    %v444 = vld [vmem:[#allocation7 + $0x1f8] sm:$0xff]
    %v445 = vld [vmem:[#allocation7 + $0x200] sm:$0xff]
    %v446 = vld [vmem:[#allocation7 + $0x208] sm:$0xff]
    %v447 = vld [vmem:[#allocation7 + $0x210] sm:$0xff]
    %v448 = vld [vmem:[#allocation7 + $0x218] sm:$0xff]
    %v449 = vld [vmem:[#allocation7 + $0x220] sm:$0xff]
    %v450 = vld [vmem:[#allocation7 + $0x228] sm:$0xff]
    %v451 = vld [vmem:[#allocation7 + $0x230] sm:$0xff]
    %v452 = vld [vmem:[#allocation7 + $0x238] sm:$0xff]
    %v453 = vld [vmem:[#allocation7 + $0x240] sm:$0xff]
    %v454 = vld [vmem:[#allocation7 + $0x248] sm:$0xff]
    %v455 = vld [vmem:[#allocation7 + $0x250] sm:$0xff]
    %v456 = vld [vmem:[#allocation7 + $0x258] sm:$0xff]
    %v457 = vld [vmem:[#allocation7 + $0x260] sm:$0xff]
    %v458 = vld [vmem:[#allocation7 + $0x268] sm:$0xff]
    %v459 = vld [vmem:[#allocation7 + $0x270] sm:$0xff]
    %v460 = vld [vmem:[#allocation7 + $0x278] sm:$0xff]
    %v461 = vld [vmem:[#allocation7 + $0x280] sm:$0xff]
    %v462 = vld [vmem:[#allocation7 + $0x288] sm:$0xff]
    %v463 = vld [vmem:[#allocation7 + $0x290] sm:$0xff]
    %v464 = vld [vmem:[#allocation7 + $0x298] sm:$0xff]
    %v465 = vld [vmem:[#allocation7 + $0x2a0] sm:$0xff]
    %v466 = vld [vmem:[#allocation7 + $0x2a8] sm:$0xff]
    %v467 = vld [vmem:[#allocation7 + $0x2b0] sm:$0xff]
    %v468 = vld [vmem:[#allocation7 + $0x2b8] sm:$0xff]
    %v469 = vld [vmem:[#allocation7 + $0x2c0] sm:$0xff]
    %v470 = vld [vmem:[#allocation7 + $0x2c8] sm:$0xff]
    %v471 = vld [vmem:[#allocation7 + $0x2d0] sm:$0xff]
    %v472 = vld [vmem:[#allocation7 + $0x2d8] sm:$0xff]
    %v473 = vld [vmem:[#allocation7 + $0x2e0] sm:$0xff]
    %v474 = vld [vmem:[#allocation7 + $0x2e8] sm:$0xff]
    %v475 = vld [vmem:[#allocation7 + $0x2f0] sm:$0xff]
    %v476 = vld [vmem:[#allocation7 + $0x2f8] sm:$0xff]
    %v477 = vld [vmem:[#allocation7 + $0x300] sm:$0xff]
    %v478 = vld [vmem:[#allocation7 + $0x308] sm:$0xff]
    %v479 = vld [vmem:[#allocation7 + $0x310] sm:$0xff]
    %v480 = vld [vmem:[#allocation7 + $0x318] sm:$0xff]
    %v481 = vld [vmem:[#allocation7 + $0x320] sm:$0xff]
    %v482 = vld [vmem:[#allocation7 + $0x328] sm:$0xff]
    %v483 = vld [vmem:[#allocation7 + $0x330] sm:$0xff]
    %v484 = vld [vmem:[#allocation7 + $0x338] sm:$0xff]
    %v485 = vld [vmem:[#allocation7 + $0x340] sm:$0xff]
    %v486 = vld [vmem:[#allocation7 + $0x348] sm:$0xff]
    %v487 = vld [vmem:[#allocation7 + $0x350] sm:$0xff]
    %v488 = vld [vmem:[#allocation7 + $0x358] sm:$0xff]
    %v489 = vld [vmem:[#allocation7 + $0x360] sm:$0xff]
    %v490 = vld [vmem:[#allocation7 + $0x368] sm:$0xff]
    %v491 = vld [vmem:[#allocation7 + $0x370] sm:$0xff]
    %v492 = vld [vmem:[#allocation7 + $0x378] sm:$0xff]
    %v493 = vld [vmem:[#allocation7 + $0x380] sm:$0xff]
    %v494 = vld [vmem:[#allocation7 + $0x388] sm:$0xff]
    %v495 = vld [vmem:[#allocation7 + $0x390] sm:$0xff]
    %v496 = vld [vmem:[#allocation7 + $0x398] sm:$0xff]
    %v497 = vld [vmem:[#allocation7 + $0x3a0] sm:$0xff]
    %v498 = vld [vmem:[#allocation7 + $0x3a8] sm:$0xff]
    %v499 = vld [vmem:[#allocation7 + $0x3b0] sm:$0xff]
    %v500 = vld [vmem:[#allocation7 + $0x3b8] sm:$0xff]
    %v501 = vld [vmem:[#allocation7 + $0x3c0] sm:$0xff]
    %v502 = vld [vmem:[#allocation7 + $0x3c8] sm:$0xff]
    %v503 = vld [vmem:[#allocation7 + $0x3d0] sm:$0xff]
    %v504 = vld [vmem:[#allocation7 + $0x3d8] sm:$0xff]
    %v505 = vld [vmem:[#allocation7 + $0x3e0] sm:$0xff]
    %v506 = vld [vmem:[#allocation7 + $0x3e8] sm:$0xff]
    %v507 = vld [vmem:[#allocation7 + $0x3f0] sm:$0xff]
    %v508 = vld [vmem:[#allocation7 + $0x3f8] sm:$0xff]
    %v509 = vld [vmem:[#allocation8] sm:$0xff]
    %v511 = vperm.slane %v509, 0
    %v512 = vperm.slane %v509, 1
    %v513 = vperm.slane %v509, 2
    %v514 = vperm.slane %v509, 3
    %v515 = vperm.slane %v509, 4
    %v516 = vperm.slane %v509, 5
    %v517 = vperm.slane %v509, 6
    %v518 = vperm.slane %v509, 7
    %527 = vmatpush.msra.mxu0 %v501
    %528 = vmatpush.msra.mxu0 %v493
    %529 = vmatpush.msra.mxu0 %v485
    %530 = vmatpush.msra.mxu0 %v477
    %531 = vmatpush.msra.mxu0 %v469
    %532 = vmatpush.msra.mxu0 %v461
    %533 = vmatpush.msra.mxu0 %v453
    %534 = vmatpush.msra.mxu0 %v445
    %535 = vmatpush.msra.mxu0 %v437
    %536 = vmatpush.msra.mxu0 %v429
    %537 = vmatpush.msra.mxu0 %v421
    %538 = vmatpush.msra.mxu0 %v413
    %539 = vmatpush.msra.mxu0 %v405
    %540 = vmatpush.msra.mxu0 %v397
    %541 = vmatpush.msra.mxu0 %v389
    %542 = vmatpush.msra.mxu0 %v381
    %543 = vmatmul.f32.gmra.mxu0 %v380
    %v544 = vpop.f32.mrf.mxu0
    %v545 = vadd.f32 %v511, %v544
    %546 = vdwg.mxu0
    %547 = vmatpush.msra.mxu0 %v502
    %548 = vmatpush.msra.mxu0 %v494
    %549 = vmatpush.msra.mxu0 %v486
    %550 = vmatpush.msra.mxu0 %v478
    %551 = vmatpush.msra.mxu0 %v470
    %552 = vmatpush.msra.mxu0 %v462
    %553 = vmatpush.msra.mxu0 %v454
    %554 = vmatpush.msra.mxu0 %v446
    %555 = vmatpush.msra.mxu0 %v438
    %556 = vmatpush.msra.mxu0 %v430
    %557 = vmatpush.msra.mxu0 %v422
    %558 = vmatpush.msra.mxu0 %v414
    %559 = vmatpush.msra.mxu0 %v406
    %560 = vmatpush.msra.mxu0 %v398
    %561 = vmatpush.msra.mxu0 %v390
    %562 = vmatpush.msra.mxu0 %v382
    %563 = vmatmul.f32.gmra.mxu0 %v380
    %v564 = vpop.f32.mrf.mxu0
    %v565 = vadd.f32 %v512, %v564
    %566 = vdwg.mxu0
    %567 = vmatpush.msra.mxu0 %v503
    %568 = vmatpush.msra.mxu0 %v495
    %569 = vmatpush.msra.mxu0 %v487
    %570 = vmatpush.msra.mxu0 %v479
    %571 = vmatpush.msra.mxu0 %v471
    %572 = vmatpush.msra.mxu0 %v463
    %573 = vmatpush.msra.mxu0 %v455
    %574 = vmatpush.msra.mxu0 %v447
    %575 = vmatpush.msra.mxu0 %v439
    %576 = vmatpush.msra.mxu0 %v431
    %577 = vmatpush.msra.mxu0 %v423
    %578 = vmatpush.msra.mxu0 %v415
    %579 = vmatpush.msra.mxu0 %v407
    %580 = vmatpush.msra.mxu0 %v399
    %581 = vmatpush.msra.mxu0 %v391
    %582 = vmatpush.msra.mxu0 %v383
    %583 = vmatmul.f32.gmra.mxu0 %v380
    %v584 = vpop.f32.mrf.mxu0
    %v585 = vadd.f32 %v513, %v584
    %586 = vdwg.mxu0
    %587 = vmatpush.msra.mxu0 %v504
    %588 = vmatpush.msra.mxu0 %v496
    %589 = vmatpush.msra.mxu0 %v488
    %590 = vmatpush.msra.mxu0 %v480
    %591 = vmatpush.msra.mxu0 %v472
    %592 = vmatpush.msra.mxu0 %v464
    %593 = vmatpush.msra.mxu0 %v456
    %594 = vmatpush.msra.mxu0 %v448
    %595 = vmatpush.msra.mxu0 %v440
    %596 = vmatpush.msra.mxu0 %v432
    %597 = vmatpush.msra.mxu0 %v424
    %598 = vmatpush.msra.mxu0 %v416
    %599 = vmatpush.msra.mxu0 %v408
    %600 = vmatpush.msra.mxu0 %v400
    %601 = vmatpush.msra.mxu0 %v392
    %602 = vmatpush.msra.mxu0 %v384
    %603 = vmatmul.f32.gmra.mxu0 %v380
    %v604 = vpop.f32.mrf.mxu0
    %v605 = vadd.f32 %v514, %v604
    %606 = vdwg.mxu0
    %607 = vmatpush.msra.mxu0 %v505
    %608 = vmatpush.msra.mxu0 %v497
    %609 = vmatpush.msra.mxu0 %v489
    %610 = vmatpush.msra.mxu0 %v481
    %611 = vmatpush.msra.mxu0 %v473
    %612 = vmatpush.msra.mxu0 %v465
    %613 = vmatpush.msra.mxu0 %v457
    %614 = vmatpush.msra.mxu0 %v449
    %615 = vmatpush.msra.mxu0 %v441
    %616 = vmatpush.msra.mxu0 %v433
    %617 = vmatpush.msra.mxu0 %v425
    %618 = vmatpush.msra.mxu0 %v417
    %619 = vmatpush.msra.mxu0 %v409
    %620 = vmatpush.msra.mxu0 %v401
    %621 = vmatpush.msra.mxu0 %v393
    %622 = vmatpush.msra.mxu0 %v385
    %623 = vmatmul.f32.gmra.mxu0 %v380
    %v624 = vpop.f32.mrf.mxu0
    %v625 = vadd.f32 %v515, %v624
    %626 = vdwg.mxu0
    %627 = vmatpush.msra.mxu0 %v506
    %628 = vmatpush.msra.mxu0 %v498
    %629 = vmatpush.msra.mxu0 %v490
    %630 = vmatpush.msra.mxu0 %v482
    %631 = vmatpush.msra.mxu0 %v474
    %632 = vmatpush.msra.mxu0 %v466
    %633 = vmatpush.msra.mxu0 %v458
    %634 = vmatpush.msra.mxu0 %v450
    %635 = vmatpush.msra.mxu0 %v442
    %636 = vmatpush.msra.mxu0 %v434
    %637 = vmatpush.msra.mxu0 %v426
    %638 = vmatpush.msra.mxu0 %v418
    %639 = vmatpush.msra.mxu0 %v410
    %640 = vmatpush.msra.mxu0 %v402
    %641 = vmatpush.msra.mxu0 %v394
    %642 = vmatpush.msra.mxu0 %v386
    %643 = vmatmul.f32.gmra.mxu0 %v380
    %v644 = vpop.f32.mrf.mxu0
    %v645 = vadd.f32 %v516, %v644
    %646 = vdwg.mxu0
    %647 = vmatpush.msra.mxu0 %v507
    %648 = vmatpush.msra.mxu0 %v499
    %649 = vmatpush.msra.mxu0 %v491
    %650 = vmatpush.msra.mxu0 %v483
    %651 = vmatpush.msra.mxu0 %v475
    %652 = vmatpush.msra.mxu0 %v467
    %653 = vmatpush.msra.mxu0 %v459
    %654 = vmatpush.msra.mxu0 %v451
    %655 = vmatpush.msra.mxu0 %v443
    %656 = vmatpush.msra.mxu0 %v435
    %657 = vmatpush.msra.mxu0 %v427
    %658 = vmatpush.msra.mxu0 %v419
    %659 = vmatpush.msra.mxu0 %v411
    %660 = vmatpush.msra.mxu0 %v403
    %661 = vmatpush.msra.mxu0 %v395
    %662 = vmatpush.msra.mxu0 %v387
    %663 = vmatmul.f32.gmra.mxu0 %v380
    %v664 = vpop.f32.mrf.mxu0
    %v665 = vadd.f32 %v517, %v664
    %666 = vdwg.mxu0
    %667 = vmatpush.msra.mxu0 %v508
    %668 = vmatpush.msra.mxu0 %v500
    %669 = vmatpush.msra.mxu0 %v492
    %670 = vmatpush.msra.mxu0 %v484
    %671 = vmatpush.msra.mxu0 %v476
    %672 = vmatpush.msra.mxu0 %v468
    %673 = vmatpush.msra.mxu0 %v460
    %674 = vmatpush.msra.mxu0 %v452
    %675 = vmatpush.msra.mxu0 %v444
    %676 = vmatpush.msra.mxu0 %v436
    %677 = vmatpush.msra.mxu0 %v428
    %678 = vmatpush.msra.mxu0 %v420
    %679 = vmatpush.msra.mxu0 %v412
    %680 = vmatpush.msra.mxu0 %v404
    %681 = vmatpush.msra.mxu0 %v396
    %682 = vmatpush.msra.mxu0 %v388
    %683 = vmatmul.f32.gmra.mxu0 %v380
    %v684 = vpop.f32.mrf.mxu0
    %v685 = vadd.f32 %v518, %v684
    %686 = vdwg.mxu0
    %687 = vst [vmem:[#allocation10] sm:$0xff] %v545
    %688 = vst [vmem:[#allocation10 + $0x8] sm:$0xff] %v565
    %689 = vst [vmem:[#allocation10 + $0x10] sm:$0xff] %v585
    %690 = vst [vmem:[#allocation10 + $0x18] sm:$0xff] %v605
    %691 = vst [vmem:[#allocation10 + $0x20] sm:$0xff] %v625
    %692 = vst [vmem:[#allocation10 + $0x28] sm:$0xff] %v645
    %693 = vst [vmem:[#allocation10 + $0x30] sm:$0xff] %v665
    %694 = vst [vmem:[#allocation10 + $0x38] sm:$0xff] %v685
    // Predicated region
    $region38: #{tpu_custom_call.1} parent=1 // pred_check
      _
    $region39: #{tpu_custom_call.1} parent=1 // pred_check_branch
      %696 = sbr.rel (0) target = $region41
    $region40: #{tpu_custom_call.1} parent=1 // pred_region
      %698 = vsyncadd [#allocation4], 0
      %s700 = sshll.u32 [#allocation10], 4
      %s701 = int_to_ptr.vmem [resolvable:$true] %s700
      %s702 = sshll.u32 %s5, 4
      %s703 = int_to_ptr.hbm [resolvable:$true] %s702
      %705 = dma.vmem_to_hbm [thread:$0]  %s701, 1024, %s703, [#allocation4]
    $region41: #{tpu_custom_call.1} parent=1 // pred_fallthru
      _
    // Predicated region
    $region42: #{tpu_custom_call.1} parent=1 // pred_check
      _
    $region43: #{tpu_custom_call.1} parent=1 // pred_check_branch
      %707 = sbr.rel (0) target = $region45
    $region44: #{tpu_custom_call.1} parent=1 // pred_region
      %709 = dma.done [#allocation4], 1024
    $region45: #{tpu_custom_call.1} parent=1 // pred_fallthru
      _
    %710 = vsyncpa [#allocation3], 1
    %711 = vsyncpa [#allocation6], 1
    %712 = vsyncpa [#allocation9], 1
    %713 = vsyncpa [#allocation4], 1

// kernel: tpu_custom_call.1
$region0: #{tpu_custom_call.1}
  #allocation0 [shape = 'u32[]', space=smem, size = 0x4, offset = 0x4, fixed_abs, tag = 'smem constant byte address 0x4 - core index']
  #allocation1 [shape = 'u32[72,128]{1,0:T(1,128)}', space=vmem, size = 0x9000, scoped, tag = 'internal scratch']
  %s0 = inlined_call_operand.hbm [shape: f32[8,1024], index: 0, kind: input, shape index: {}]
  %s1 = inlined_call_operand.hbm [shape: f32[1024,128], index: 1, kind: input, shape index: {}]
  %s2 = inlined_call_operand.vmem [shape: f32[1,128], index: 2, kind: input, shape index: {}]
  %s3 = inlined_call_operand.hbm [shape: f32[128,1024], index: 3, kind: input, shape index: {}]
  %s4 = inlined_call_operand.hbm [shape: f32[1,1024], index: 4, kind: input, shape index: {}]
  %s5 = inlined_call_operand.hbm [shape: f32[8,1024], index: 5, kind: output, shape index: {}]
  %s6 = sld [smem:[#allocation0]]
  $region46: #{tpu_custom_call.1} parent=0
    _
  %s8 = ssub.s32 1, %s6
  %s9 = scalar_select 0, %s8, %s6
  $region1: #{tpu_custom_call.1} parent=0
    #allocation2 [shape = 'u8[32768]{0}', space=vmem, size = 0x8000, scoped, tag = 'input window, operand 0, single buffered']
    #allocation3 [shape = 's32[1]{0}', space=sflag, size = 0x4, scoped, tag = 'scoped memory for tpu_custom_call.1']
    #allocation4 [shape = 's32[1]{0}', space=sflag, size = 0x4, scoped, tag = 'scoped memory for tpu_custom_call.1']
    #allocation5 [shape = 'u8[524288]{0}', space=vmem, size = 0x80000, scoped, tag = 'input window, operand 1, single buffered']
    #allocation6 [shape = 's32[1]{0}', space=sflag, size = 0x4, scoped, tag = 'scoped memory for tpu_custom_call.1']
    #allocation7 [shape = 'u8[524288]{0}', space=vmem, size = 0x80000, scoped, tag = 'input window, operand 3, single buffered']
    #allocation8 [shape = 'u8[4096]{0}', space=vmem, size = 0x1000, scoped, tag = 'input window, operand 4, single buffered']
    #allocation9 [shape = 's32[1]{0}', space=sflag, size = 0x4, scoped, tag = 'scoped memory for tpu_custom_call.1']
    #allocation10 [shape = 'u8[32768]{0}', space=vmem, size = 0x8000, scoped, tag = 'output window, operand 0, single buffered']
    %10 = vsyncpa [#allocation3], 0
    %11 = vsyncpa [#allocation6], 0
    %12 = vsyncpa [#allocation9], 0
    %13 = vsyncpa [#allocation4], 0
    // Predicated region
    $region2: #{tpu_custom_call.1} parent=1 // pred_check
      _
    $region3: #{tpu_custom_call.1} parent=1 // pred_check_branch
      %15 = sbr.rel (0) target = $region5
    $region4: #{tpu_custom_call.1} parent=1 // pred_region
      %17 = vsyncadd [#allocation3], 0
      %s19 = sshll.u32 %s0, 4
      %s20 = int_to_ptr.hbm [resolvable:$true] %s19
      %s21 = sshll.u32 [#allocation2], 4
      %s22 = int_to_ptr.vmem [resolvable:$true] %s21
      %24 = dma.hbm_to_vmem [thread:$0]  %s20, 1024, %s22, [#allocation3]
    $region5: #{tpu_custom_call.1} parent=1 // pred_fallthru
      _
    // Predicated region
    $region6: #{tpu_custom_call.1} parent=1 // pred_check
      _
    $region7: #{tpu_custom_call.1} parent=1 // pred_check_branch
      %26 = sbr.rel (0) target = $region9
    $region8: #{tpu_custom_call.1} parent=1 // pred_region
      %28 = vsyncadd [#allocation6], 0
      %s29 = sshll.u32 %s1, 4
      %s30 = int_to_ptr.hbm [resolvable:$true] %s29
      %s31 = sshll.u32 [#allocation5], 4
      %s32 = int_to_ptr.vmem [resolvable:$true] %s31
      %37 = dma.hbm_to_vmem [thread:$0]  %s30, 16384, %s32, [#allocation6], 128, 128, 8
    $region9: #{tpu_custom_call.1} parent=1 // pred_fallthru
      _
    // Predicated region
    $region10: #{tpu_custom_call.1} parent=1 // pred_check
      _
    $region11: #{tpu_custom_call.1} parent=1 // pred_check_branch
      %39 = sbr.rel (0) target = $region13
    $region12: #{tpu_custom_call.1} parent=1 // pred_region
      _
    $region13: #{tpu_custom_call.1} parent=1 // pred_fallthru
      _
    // Predicated region
    $region14: #{tpu_custom_call.1} parent=1 // pred_check
      _
    $region15: #{tpu_custom_call.1} parent=1 // pred_check_branch
      %41 = sbr.rel (0) target = $region17
    $region16: #{tpu_custom_call.1} parent=1 // pred_region
      %43 = vsyncadd [#allocation6], 0
      %s44 = sshll.u32 %s3, 4
      %s45 = int_to_ptr.hbm [resolvable:$true] %s44
      %s46 = sshll.u32 [#allocation7], 4
      %s47 = int_to_ptr.vmem [resolvable:$true] %s46
      %52 = dma.hbm_to_vmem [thread:$0]  %s45, 16384, %s47, [#allocation6], 1024, 1024, 64
    $region17: #{tpu_custom_call.1} parent=1 // pred_fallthru
      _
    // Predicated region
    $region18: #{tpu_custom_call.1} parent=1 // pred_check
      _
    $region19: #{tpu_custom_call.1} parent=1 // pred_check_branch
      %54 = sbr.rel (0) target = $region21
    $region20: #{tpu_custom_call.1} parent=1 // pred_region
      %56 = vsyncadd [#allocation9], 0
      %s58 = sshll.u32 %s4, 4
      %s59 = int_to_ptr.hbm [resolvable:$true] %s58
      %s60 = sshll.u32 [#allocation8], 4
      %s61 = int_to_ptr.vmem [resolvable:$true] %s60
      %63 = dma.hbm_to_vmem [thread:$0]  %s59, 128, %s61, [#allocation9]
    $region21: #{tpu_custom_call.1} parent=1 // pred_fallthru
      _
    // Predicated region
    $region22: #{tpu_custom_call.1} parent=1 // pred_check
      _
    $region23: #{tpu_custom_call.1} parent=1 // pred_check_branch
      %65 = sbr.rel (0) target = $region25
    $region24: #{tpu_custom_call.1} parent=1 // pred_region
      %67 = dma.done [#allocation3], 1024
    $region25: #{tpu_custom_call.1} parent=1 // pred_fallthru
      _
    // Predicated region
    $region26: #{tpu_custom_call.1} parent=1 // pred_check
      _
    $region27: #{tpu_custom_call.1} parent=1 // pred_check_branch
      %69 = sbr.rel (0) target = $region29
    $region28: #{tpu_custom_call.1} parent=1 // pred_region
      %71 = dma.done [#allocation6], 16384
    $region29: #{tpu_custom_call.1} parent=1 // pred_fallthru
      _
    // Predicated region
    $region30: #{tpu_custom_call.1} parent=1 // pred_check
      _
    $region31: #{tpu_custom_call.1} parent=1 // pred_check_branch
      %73 = sbr.rel (0) target = $region33
    $region32: #{tpu_custom_call.1} parent=1 // pred_region
      %75 = dma.done [#allocation6], 16384
    $region33: #{tpu_custom_call.1} parent=1 // pred_fallthru
      _
    // Predicated region
    $region34: #{tpu_custom_call.1} parent=1 // pred_check
      _
    $region35: #{tpu_custom_call.1} parent=1 // pred_check_branch
      %77 = sbr.rel (0) target = $region37
    $region36: #{tpu_custom_call.1} parent=1 // pred_region
      %79 = dma.done [#allocation9], 128
    $region37: #{tpu_custom_call.1} parent=1 // pred_fallthru
      _
    %v80 = vld [vmem:[#allocation2] sm:$0xff]
    %v81 = vld [vmem:[#allocation2 + $0x8] sm:$0xff]
    %v82 = vld [vmem:[#allocation2 + $0x10] sm:$0xff]
    %v83 = vld [vmem:[#allocation2 + $0x18] sm:$0xff]
    %v84 = vld [vmem:[#allocation2 + $0x20] sm:$0xff]
    %v85 = vld [vmem:[#allocation2 + $0x28] sm:$0xff]
    %v86 = vld [vmem:[#allocation2 + $0x30] sm:$0xff]
    %v87 = vld [vmem:[#allocation2 + $0x38] sm:$0xff]
    %v88 = vld [vmem:[#allocation5] sm:$0xff]
    %v89 = vld [vmem:[#allocation5 + $0x8] sm:$0xff]
    %v90 = vld [vmem:[#allocation5 + $0x10] sm:$0xff]
    %v91 = vld [vmem:[#allocation5 + $0x18] sm:$0xff]
    %v92 = vld [vmem:[#allocation5 + $0x20] sm:$0xff]
    %v93 = vld [vmem:[#allocation5 + $0x28] sm:$0xff]
    %v94 = vld [vmem:[#allocation5 + $0x30] sm:$0xff]
    %v95 = vld [vmem:[#allocation5 + $0x38] sm:$0xff]
    %v96 = vld [vmem:[#allocation5 + $0x40] sm:$0xff]
    %v97 = vld [vmem:[#allocation5 + $0x48] sm:$0xff]
    %v98 = vld [vmem:[#allocation5 + $0x50] sm:$0xff]
    %v99 = vld [vmem:[#allocation5 + $0x58] sm:$0xff]
    %v100 = vld [vmem:[#allocation5 + $0x60] sm:$0xff]
    %v101 = vld [vmem:[#allocation5 + $0x68] sm:$0xff]
    %v102 = vld [vmem:[#allocation5 + $0x70] sm:$0xff]
    %v103 = vld [vmem:[#allocation5 + $0x78] sm:$0xff]
    %v104 = vld [vmem:[#allocation5 + $0x80] sm:$0xff]
    %v105 = vld [vmem:[#allocation5 + $0x88] sm:$0xff]
    %v106 = vld [vmem:[#allocation5 + $0x90] sm:$0xff]
    %v107 = vld [vmem:[#allocation5 + $0x98] sm:$0xff]
    %v108 = vld [vmem:[#allocation5 + $0xa0] sm:$0xff]
    %v109 = vld [vmem:[#allocation5 + $0xa8] sm:$0xff]
    %v110 = vld [vmem:[#allocation5 + $0xb0] sm:$0xff]
    %v111 = vld [vmem:[#allocation5 + $0xb8] sm:$0xff]
    %v112 = vld [vmem:[#allocation5 + $0xc0] sm:$0xff]
    %v113 = vld [vmem:[#allocation5 + $0xc8] sm:$0xff]
    %v114 = vld [vmem:[#allocation5 + $0xd0] sm:$0xff]
    %v115 = vld [vmem:[#allocation5 + $0xd8] sm:$0xff]
    %v116 = vld [vmem:[#allocation5 + $0xe0] sm:$0xff]
    %v117 = vld [vmem:[#allocation5 + $0xe8] sm:$0xff]
    %v118 = vld [vmem:[#allocation5 + $0xf0] sm:$0xff]
    %v119 = vld [vmem:[#allocation5 + $0xf8] sm:$0xff]
    %v120 = vld [vmem:[#allocation5 + $0x100] sm:$0xff]
    %v121 = vld [vmem:[#allocation5 + $0x108] sm:$0xff]
    %v122 = vld [vmem:[#allocation5 + $0x110] sm:$0xff]
    %v123 = vld [vmem:[#allocation5 + $0x118] sm:$0xff]
    %v124 = vld [vmem:[#allocation5 + $0x120] sm:$0xff]
    %v125 = vld [vmem:[#allocation5 + $0x128] sm:$0xff]
    %v126 = vld [vmem:[#allocation5 + $0x130] sm:$0xff]
    %v127 = vld [vmem:[#allocation5 + $0x138] sm:$0xff]
    %v128 = vld [vmem:[#allocation5 + $0x140] sm:$0xff]
    %v129 = vld [vmem:[#allocation5 + $0x148] sm:$0xff]
    %v130 = vld [vmem:[#allocation5 + $0x150] sm:$0xff]
    %v131 = vld [vmem:[#allocation5 + $0x158] sm:$0xff]
    %v132 = vld [vmem:[#allocation5 + $0x160] sm:$0xff]
    %v133 = vld [vmem:[#allocation5 + $0x168] sm:$0xff]
    %v134 = vld [vmem:[#allocation5 + $0x170] sm:$0xff]
    %v135 = vld [vmem:[#allocation5 + $0x178] sm:$0xff]
    %v136 = vld [vmem:[#allocation5 + $0x180] sm:$0xff]
    %v137 = vld [vmem:[#allocation5 + $0x188] sm:$0xff]
    %v138 = vld [vmem:[#allocation5 + $0x190] sm:$0xff]
    %v139 = vld [vmem:[#allocation5 + $0x198] sm:$0xff]
    %v140 = vld [vmem:[#allocation5 + $0x1a0] sm:$0xff]
    %v141 = vld [vmem:[#allocation5 + $0x1a8] sm:$0xff]
    %v142 = vld [vmem:[#allocation5 + $0x1b0] sm:$0xff]
    %v143 = vld [vmem:[#allocation5 + $0x1b8] sm:$0xff]
    %v144 = vld [vmem:[#allocation5 + $0x1c0] sm:$0xff]
    %v145 = vld [vmem:[#allocation5 + $0x1c8] sm:$0xff]
    %v146 = vld [vmem:[#allocation5 + $0x1d0] sm:$0xff]
    %v147 = vld [vmem:[#allocation5 + $0x1d8] sm:$0xff]
    %v148 = vld [vmem:[#allocation5 + $0x1e0] sm:$0xff]
    %v149 = vld [vmem:[#allocation5 + $0x1e8] sm:$0xff]
    %v150 = vld [vmem:[#allocation5 + $0x1f0] sm:$0xff]
    %v151 = vld [vmem:[#allocation5 + $0x1f8] sm:$0xff]
    %v152 = vld [vmem:[#allocation5 + $0x200] sm:$0xff]
    %v153 = vld [vmem:[#allocation5 + $0x208] sm:$0xff]
    %v154 = vld [vmem:[#allocation5 + $0x210] sm:$0xff]
    %v155 = vld [vmem:[#allocation5 + $0x218] sm:$0xff]
    %v156 = vld [vmem:[#allocation5 + $0x220] sm:$0xff]
    %v157 = vld [vmem:[#allocation5 + $0x228] sm:$0xff]
    %v158 = vld [vmem:[#allocation5 + $0x230] sm:$0xff]
    %v159 = vld [vmem:[#allocation5 + $0x238] sm:$0xff]
    %v160 = vld [vmem:[#allocation5 + $0x240] sm:$0xff]
    %v161 = vld [vmem:[#allocation5 + $0x248] sm:$0xff]
    %v162 = vld [vmem:[#allocation5 + $0x250] sm:$0xff]
    %v163 = vld [vmem:[#allocation5 + $0x258] sm:$0xff]
    %v164 = vld [vmem:[#allocation5 + $0x260] sm:$0xff]
    %v165 = vld [vmem:[#allocation5 + $0x268] sm:$0xff]
    %v166 = vld [vmem:[#allocation5 + $0x270] sm:$0xff]
    %v167 = vld [vmem:[#allocation5 + $0x278] sm:$0xff]
    %v168 = vld [vmem:[#allocation5 + $0x280] sm:$0xff]
    %v169 = vld [vmem:[#allocation5 + $0x288] sm:$0xff]
    %v170 = vld [vmem:[#allocation5 + $0x290] sm:$0xff]
    %v171 = vld [vmem:[#allocation5 + $0x298] sm:$0xff]
    %v172 = vld [vmem:[#allocation5 + $0x2a0] sm:$0xff]
    %v173 = vld [vmem:[#allocation5 + $0x2a8] sm:$0xff]
    %v174 = vld [vmem:[#allocation5 + $0x2b0] sm:$0xff]
    %v175 = vld [vmem:[#allocation5 + $0x2b8] sm:$0xff]
    %v176 = vld [vmem:[#allocation5 + $0x2c0] sm:$0xff]
    %v177 = vld [vmem:[#allocation5 + $0x2c8] sm:$0xff]
    %v178 = vld [vmem:[#allocation5 + $0x2d0] sm:$0xff]
    %v179 = vld [vmem:[#allocation5 + $0x2d8] sm:$0xff]
    %v180 = vld [vmem:[#allocation5 + $0x2e0] sm:$0xff]
    %v181 = vld [vmem:[#allocation5 + $0x2e8] sm:$0xff]
    %v182 = vld [vmem:[#allocation5 + $0x2f0] sm:$0xff]
    %v183 = vld [vmem:[#allocation5 + $0x2f8] sm:$0xff]
    %v184 = vld [vmem:[#allocation5 + $0x300] sm:$0xff]
    %v185 = vld [vmem:[#allocation5 + $0x308] sm:$0xff]
    %v186 = vld [vmem:[#allocation5 + $0x310] sm:$0xff]
    %v187 = vld [vmem:[#allocation5 + $0x318] sm:$0xff]
    %v188 = vld [vmem:[#allocation5 + $0x320] sm:$0xff]
    %v189 = vld [vmem:[#allocation5 + $0x328] sm:$0xff]
    %v190 = vld [vmem:[#allocation5 + $0x330] sm:$0xff]
    %v191 = vld [vmem:[#allocation5 + $0x338] sm:$0xff]
    %v192 = vld [vmem:[#allocation5 + $0x340] sm:$0xff]
    %v193 = vld [vmem:[#allocation5 + $0x348] sm:$0xff]
    %v194 = vld [vmem:[#allocation5 + $0x350] sm:$0xff]
    %v195 = vld [vmem:[#allocation5 + $0x358] sm:$0xff]
    %v196 = vld [vmem:[#allocation5 + $0x360] sm:$0xff]
    %v197 = vld [vmem:[#allocation5 + $0x368] sm:$0xff]
    %v198 = vld [vmem:[#allocation5 + $0x370] sm:$0xff]
    %v199 = vld [vmem:[#allocation5 + $0x378] sm:$0xff]
    %v200 = vld [vmem:[#allocation5 + $0x380] sm:$0xff]
    %v201 = vld [vmem:[#allocation5 + $0x388] sm:$0xff]
    %v202 = vld [vmem:[#allocation5 + $0x390] sm:$0xff]
    %v203 = vld [vmem:[#allocation5 + $0x398] sm:$0xff]
    %v204 = vld [vmem:[#allocation5 + $0x3a0] sm:$0xff]
    %v205 = vld [vmem:[#allocation5 + $0x3a8] sm:$0xff]
    %v206 = vld [vmem:[#allocation5 + $0x3b0] sm:$0xff]
    %v207 = vld [vmem:[#allocation5 + $0x3b8] sm:$0xff]
    %v208 = vld [vmem:[#allocation5 + $0x3c0] sm:$0xff]
    %v209 = vld [vmem:[#allocation5 + $0x3c8] sm:$0xff]
    %v210 = vld [vmem:[#allocation5 + $0x3d0] sm:$0xff]
    %v211 = vld [vmem:[#allocation5 + $0x3d8] sm:$0xff]
    %v212 = vld [vmem:[#allocation5 + $0x3e0] sm:$0xff]
    %v213 = vld [vmem:[#allocation5 + $0x3e8] sm:$0xff]
    %v214 = vld [vmem:[#allocation5 + $0x3f0] sm:$0xff]
    %v215 = vld [vmem:[#allocation5 + $0x3f8] sm:$0xff]
    %v216 = vld [vmem:[%s2] sm:$0x1]
    %v218 = vperm.slane %v216, 0
    %220 = vmatpush.msra.mxu0 %v103
    %221 = vmatpush.msra.mxu0 %v102
    %222 = vmatpush.msra.mxu0 %v101
    %223 = vmatpush.msra.mxu0 %v100
    %224 = vmatpush.msra.mxu0 %v99
    %225 = vmatpush.msra.mxu0 %v98
    %226 = vmatpush.msra.mxu0 %v97
    %227 = vmatpush.msra.mxu0 %v96
    %228 = vmatpush.msra.mxu0 %v95
    %229 = vmatpush.msra.mxu0 %v94
    %230 = vmatpush.msra.mxu0 %v93
    %231 = vmatpush.msra.mxu0 %v92
    %232 = vmatpush.msra.mxu0 %v91
    %233 = vmatpush.msra.mxu0 %v90
    %234 = vmatpush.msra.mxu0 %v89
    %235 = vmatpush.msra.mxu0 %v88
    %236 = vmatmul.f32.gmra.mxu0 %v80
    %v237 = vpop.f32.mrf.mxu0
    %v238 = vadd.f32 %v218, %v237
    %239 = vdwg.mxu0
    %240 = vmatpush.msra.mxu0 %v119
    %241 = vmatpush.msra.mxu0 %v118
    %242 = vmatpush.msra.mxu0 %v117
    %243 = vmatpush.msra.mxu0 %v116
    %244 = vmatpush.msra.mxu0 %v115
    %245 = vmatpush.msra.mxu0 %v114
    %246 = vmatpush.msra.mxu0 %v113
    %247 = vmatpush.msra.mxu0 %v112
    %248 = vmatpush.msra.mxu0 %v111
    %249 = vmatpush.msra.mxu0 %v110
    %250 = vmatpush.msra.mxu0 %v109
    %251 = vmatpush.msra.mxu0 %v108
    %252 = vmatpush.msra.mxu0 %v107
    %253 = vmatpush.msra.mxu0 %v106
    %254 = vmatpush.msra.mxu0 %v105
    %255 = vmatpush.msra.mxu0 %v104
    %256 = vmatmul.f32.gmra.mxu0 %v81
    %v257 = vpop.f32.mrf.mxu0
    %v258 = vadd.f32 %v238, %v257
    %259 = vdwg.mxu0
    %260 = vmatpush.msra.mxu0 %v135
    %261 = vmatpush.msra.mxu0 %v134
    %262 = vmatpush.msra.mxu0 %v133
    %263 = vmatpush.msra.mxu0 %v132
    %264 = vmatpush.msra.mxu0 %v131
    %265 = vmatpush.msra.mxu0 %v130
    %266 = vmatpush.msra.mxu0 %v129
    %267 = vmatpush.msra.mxu0 %v128
    %268 = vmatpush.msra.mxu0 %v127
    %269 = vmatpush.msra.mxu0 %v126
    %270 = vmatpush.msra.mxu0 %v125
    %271 = vmatpush.msra.mxu0 %v124
    %272 = vmatpush.msra.mxu0 %v123
    %273 = vmatpush.msra.mxu0 %v122
    %274 = vmatpush.msra.mxu0 %v121
    %275 = vmatpush.msra.mxu0 %v120
    %276 = vmatmul.f32.gmra.mxu0 %v82
    %v277 = vpop.f32.mrf.mxu0
    %v278 = vadd.f32 %v258, %v277
    %279 = vdwg.mxu0
    %280 = vmatpush.msra.mxu0 %v151
    %281 = vmatpush.msra.mxu0 %v150
    %282 = vmatpush.msra.mxu0 %v149
    %283 = vmatpush.msra.mxu0 %v148
    %284 = vmatpush.msra.mxu0 %v147
    %285 = vmatpush.msra.mxu0 %v146
    %286 = vmatpush.msra.mxu0 %v145
    %287 = vmatpush.msra.mxu0 %v144
    %288 = vmatpush.msra.mxu0 %v143
    %289 = vmatpush.msra.mxu0 %v142
    %290 = vmatpush.msra.mxu0 %v141
    %291 = vmatpush.msra.mxu0 %v140
    %292 = vmatpush.msra.mxu0 %v139
    %293 = vmatpush.msra.mxu0 %v138
    %294 = vmatpush.msra.mxu0 %v137
    %295 = vmatpush.msra.mxu0 %v136
    %296 = vmatmul.f32.gmra.mxu0 %v83
    %v297 = vpop.f32.mrf.mxu0
    %v298 = vadd.f32 %v278, %v297
    %299 = vdwg.mxu0
    %300 = vmatpush.msra.mxu0 %v167
    %301 = vmatpush.msra.mxu0 %v166
    %302 = vmatpush.msra.mxu0 %v165
    %303 = vmatpush.msra.mxu0 %v164
    %304 = vmatpush.msra.mxu0 %v163
    %305 = vmatpush.msra.mxu0 %v162
    %306 = vmatpush.msra.mxu0 %v161
    %307 = vmatpush.msra.mxu0 %v160
    %308 = vmatpush.msra.mxu0 %v159
    %309 = vmatpush.msra.mxu0 %v158
    %310 = vmatpush.msra.mxu0 %v157
    %311 = vmatpush.msra.mxu0 %v156
    %312 = vmatpush.msra.mxu0 %v155
    %313 = vmatpush.msra.mxu0 %v154
    %314 = vmatpush.msra.mxu0 %v153
    %315 = vmatpush.msra.mxu0 %v152
    %316 = vmatmul.f32.gmra.mxu0 %v84
    %v317 = vpop.f32.mrf.mxu0
    %v318 = vadd.f32 %v298, %v317
    %319 = vdwg.mxu0
    %320 = vmatpush.msra.mxu0 %v183
    %321 = vmatpush.msra.mxu0 %v182
    %322 = vmatpush.msra.mxu0 %v181
    %323 = vmatpush.msra.mxu0 %v180
    %324 = vmatpush.msra.mxu0 %v179
    %325 = vmatpush.msra.mxu0 %v178
    %326 = vmatpush.msra.mxu0 %v177
    %327 = vmatpush.msra.mxu0 %v176
    %328 = vmatpush.msra.mxu0 %v175
    %329 = vmatpush.msra.mxu0 %v174
    %330 = vmatpush.msra.mxu0 %v173
    %331 = vmatpush.msra.mxu0 %v172
    %332 = vmatpush.msra.mxu0 %v171
    %333 = vmatpush.msra.mxu0 %v170
    %334 = vmatpush.msra.mxu0 %v169
    %335 = vmatpush.msra.mxu0 %v168
    %336 = vmatmul.f32.gmra.mxu0 %v85
    %v337 = vpop.f32.mrf.mxu0
    %v338 = vadd.f32 %v318, %v337
    %339 = vdwg.mxu0
    %340 = vmatpush.msra.mxu0 %v199
    %341 = vmatpush.msra.mxu0 %v198
    %342 = vmatpush.msra.mxu0 %v197
    %343 = vmatpush.msra.mxu0 %v196
    %344 = vmatpush.msra.mxu0 %v195
    %345 = vmatpush.msra.mxu0 %v194
    %346 = vmatpush.msra.mxu0 %v193
    %347 = vmatpush.msra.mxu0 %v192
    %348 = vmatpush.msra.mxu0 %v191
    %349 = vmatpush.msra.mxu0 %v190
    %350 = vmatpush.msra.mxu0 %v189
    %351 = vmatpush.msra.mxu0 %v188
    %352 = vmatpush.msra.mxu0 %v187
    %353 = vmatpush.msra.mxu0 %v186
    %354 = vmatpush.msra.mxu0 %v185
    %355 = vmatpush.msra.mxu0 %v184
    %356 = vmatmul.f32.gmra.mxu0 %v86
    %v357 = vpop.f32.mrf.mxu0
    %v358 = vadd.f32 %v338, %v357
    %359 = vdwg.mxu0
    %360 = vmatpush.msra.mxu0 %v215
    %361 = vmatpush.msra.mxu0 %v214
    %362 = vmatpush.msra.mxu0 %v213
    %363 = vmatpush.msra.mxu0 %v212
    %364 = vmatpush.msra.mxu0 %v211
    %365 = vmatpush.msra.mxu0 %v210
    %366 = vmatpush.msra.mxu0 %v209
    %367 = vmatpush.msra.mxu0 %v208
    %368 = vmatpush.msra.mxu0 %v207
    %369 = vmatpush.msra.mxu0 %v206
    %370 = vmatpush.msra.mxu0 %v205
    %371 = vmatpush.msra.mxu0 %v204
    %372 = vmatpush.msra.mxu0 %v203
    %373 = vmatpush.msra.mxu0 %v202
    %374 = vmatpush.msra.mxu0 %v201
    %375 = vmatpush.msra.mxu0 %v200
    %376 = vmatmul.f32.gmra.mxu0 %v87
    %v377 = vpop.f32.mrf.mxu0
    %v378 = vadd.f32 %v358, %v377
    %379 = vdwg.mxu0
    %v380 = vmax.f32 %v378, 0.0
    %v381 = vld [vmem:[#allocation7] sm:$0xff]
    %v382 = vld [vmem:[#allocation7 + $0x8] sm:$0xff]
    %v383 = vld [vmem:[#allocation7 + $0x10] sm:$0xff]
    %v384 = vld [vmem:[#allocation7 + $0x18] sm:$0xff]
    %v385 = vld [vmem:[#allocation7 + $0x20] sm:$0xff]
    %v386 = vld [vmem:[#allocation7 + $0x28] sm:$0xff]
    %v387 = vld [vmem:[#allocation7 + $0x30] sm:$0xff]
    %v388 = vld [vmem:[#allocation7 + $0x38] sm:$0xff]
    %v389 = vld [vmem:[#allocation7 + $0x40] sm:$0xff]
    %v390 = vld [vmem:[#allocation7 + $0x48] sm:$0xff]
    %v391 = vld [vmem:[#allocation7 + $0x50] sm:$0xff]
    %v392 = vld [vmem:[#allocation7 + $0x58] sm:$0xff]
    %v393 = vld [vmem:[#allocation7 + $0x60] sm:$0xff]
    %v394 = vld [vmem:[#allocation7 + $0x68] sm:$0xff]
    %v395 = vld [vmem:[#allocation7 + $0x70] sm:$0xff]
    %v396 = vld [vmem:[#allocation7 + $0x78] sm:$0xff]
    %v397 = vld [vmem:[#allocation7 + $0x80] sm:$0xff]
    %v398 = vld [vmem:[#allocation7 + $0x88] sm:$0xff]
    %v399 = vld [vmem:[#allocation7 + $0x90] sm:$0xff]
    %v400 = vld [vmem:[#allocation7 + $0x98] sm:$0xff]
    %v401 = vld [vmem:[#allocation7 + $0xa0] sm:$0xff]
    %v402 = vld [vmem:[#allocation7 + $0xa8] sm:$0xff]
    %v403 = vld [vmem:[#allocation7 + $0xb0] sm:$0xff]
    %v404 = vld [vmem:[#allocation7 + $0xb8] sm:$0xff]
    %v405 = vld [vmem:[#allocation7 + $0xc0] sm:$0xff]
    %v406 = vld [vmem:[#allocation7 + $0xc8] sm:$0xff]
    %v407 = vld [vmem:[#allocation7 + $0xd0] sm:$0xff]
    %v408 = vld [vmem:[#allocation7 + $0xd8] sm:$0xff]
    %v409 = vld [vmem:[#allocation7 + $0xe0] sm:$0xff]
    %v410 = vld [vmem:[#allocation7 + $0xe8] sm:$0xff]
    %v411 = vld [vmem:[#allocation7 + $0xf0] sm:$0xff]
    %v412 = vld [vmem:[#allocation7 + $0xf8] sm:$0xff]
    %v413 = vld [vmem:[#allocation7 + $0x100] sm:$0xff]
    %v414 = vld [vmem:[#allocation7 + $0x108] sm:$0xff]
    %v415 = vld [vmem:[#allocation7 + $0x110] sm:$0xff]
    %v416 = vld [vmem:[#allocation7 + $0x118] sm:$0xff]
    %v417 = vld [vmem:[#allocation7 + $0x120] sm:$0xff]
    %v418 = vld [vmem:[#allocation7 + $0x128] sm:$0xff]
    %v419 = vld [vmem:[#allocation7 + $0x130] sm:$0xff]
    %v420 = vld [vmem:[#allocation7 + $0x138] sm:$0xff]
    %v421 = vld [vmem:[#allocation7 + $0x140] sm:$0xff]
    %v422 = vld [vmem:[#allocation7 + $0x148] sm:$0xff]
    %v423 = vld [vmem:[#allocation7 + $0x150] sm:$0xff]
    %v424 = vld [vmem:[#allocation7 + $0x158] sm:$0xff]
    %v425 = vld [vmem:[#allocation7 + $0x160] sm:$0xff]
    %v426 = vld [vmem:[#allocation7 + $0x168] sm:$0xff]
    %v427 = vld [vmem:[#allocation7 + $0x170] sm:$0xff]
    %v428 = vld [vmem:[#allocation7 + $0x178] sm:$0xff]
    %v429 = vld [vmem:[#allocation7 + $0x180] sm:$0xff]
    %v430 = vld [vmem:[#allocation7 + $0x188] sm:$0xff]
    %v431 = vld [vmem:[#allocation7 + $0x190] sm:$0xff]
    %v432 = vld [vmem:[#allocation7 + $0x198] sm:$0xff]
    %v433 = vld [vmem:[#allocation7 + $0x1a0] sm:$0xff]
    %v434 = vld [vmem:[#allocation7 + $0x1a8] sm:$0xff]
    %v435 = vld [vmem:[#allocation7 + $0x1b0] sm:$0xff]
    %v436 = vld [vmem:[#allocation7 + $0x1b8] sm:$0xff]
    %v437 = vld [vmem:[#allocation7 + $0x1c0] sm:$0xff]
    %v438 = vld [vmem:[#allocation7 + $0x1c8] sm:$0xff]
    %v439 = vld [vmem:[#allocation7 + $0x1d0] sm:$0xff]
    %v440 = vld [vmem:[#allocation7 + $0x1d8] sm:$0xff]
    %v441 = vld [vmem:[#allocation7 + $0x1e0] sm:$0xff]
    %v442 = vld [vmem:[#allocation7 + $0x1e8] sm:$0xff]
    %v443 = vld [vmem:[#allocation7 + $0x1f0] sm:$0xff]
    %v444 = vld [vmem:[#allocation7 + $0x1f8] sm:$0xff]
    %v445 = vld [vmem:[#allocation7 + $0x200] sm:$0xff]
    %v446 = vld [vmem:[#allocation7 + $0x208] sm:$0xff]
    %v447 = vld [vmem:[#allocation7 + $0x210] sm:$0xff]
    %v448 = vld [vmem:[#allocation7 + $0x218] sm:$0xff]
    %v449 = vld [vmem:[#allocation7 + $0x220] sm:$0xff]
    %v450 = vld [vmem:[#allocation7 + $0x228] sm:$0xff]
    %v451 = vld [vmem:[#allocation7 + $0x230] sm:$0xff]
    %v452 = vld [vmem:[#allocation7 + $0x238] sm:$0xff]
    %v453 = vld [vmem:[#allocation7 + $0x240] sm:$0xff]
    %v454 = vld [vmem:[#allocation7 + $0x248] sm:$0xff]
    %v455 = vld [vmem:[#allocation7 + $0x250] sm:$0xff]
    %v456 = vld [vmem:[#allocation7 + $0x258] sm:$0xff]
    %v457 = vld [vmem:[#allocation7 + $0x260] sm:$0xff]
    %v458 = vld [vmem:[#allocation7 + $0x268] sm:$0xff]
    %v459 = vld [vmem:[#allocation7 + $0x270] sm:$0xff]
    %v460 = vld [vmem:[#allocation7 + $0x278] sm:$0xff]
    %v461 = vld [vmem:[#allocation7 + $0x280] sm:$0xff]
    %v462 = vld [vmem:[#allocation7 + $0x288] sm:$0xff]
    %v463 = vld [vmem:[#allocation7 + $0x290] sm:$0xff]
    %v464 = vld [vmem:[#allocation7 + $0x298] sm:$0xff]
    %v465 = vld [vmem:[#allocation7 + $0x2a0] sm:$0xff]
    %v466 = vld [vmem:[#allocation7 + $0x2a8] sm:$0xff]
    %v467 = vld [vmem:[#allocation7 + $0x2b0] sm:$0xff]
    %v468 = vld [vmem:[#allocation7 + $0x2b8] sm:$0xff]
    %v469 = vld [vmem:[#allocation7 + $0x2c0] sm:$0xff]
    %v470 = vld [vmem:[#allocation7 + $0x2c8] sm:$0xff]
    %v471 = vld [vmem:[#allocation7 + $0x2d0] sm:$0xff]
    %v472 = vld [vmem:[#allocation7 + $0x2d8] sm:$0xff]
    %v473 = vld [vmem:[#allocation7 + $0x2e0] sm:$0xff]
    %v474 = vld [vmem:[#allocation7 + $0x2e8] sm:$0xff]
    %v475 = vld [vmem:[#allocation7 + $0x2f0] sm:$0xff]
    %v476 = vld [vmem:[#allocation7 + $0x2f8] sm:$0xff]
    %v477 = vld [vmem:[#allocation7 + $0x300] sm:$0xff]
    %v478 = vld [vmem:[#allocation7 + $0x308] sm:$0xff]
    %v479 = vld [vmem:[#allocation7 + $0x310] sm:$0xff]
    %v480 = vld [vmem:[#allocation7 + $0x318] sm:$0xff]
    %v481 = vld [vmem:[#allocation7 + $0x320] sm:$0xff]
    %v482 = vld [vmem:[#allocation7 + $0x328] sm:$0xff]
    %v483 = vld [vmem:[#allocation7 + $0x330] sm:$0xff]
    %v484 = vld [vmem:[#allocation7 + $0x338] sm:$0xff]
    %v485 = vld [vmem:[#allocation7 + $0x340] sm:$0xff]
    %v486 = vld [vmem:[#allocation7 + $0x348] sm:$0xff]
    %v487 = vld [vmem:[#allocation7 + $0x350] sm:$0xff]
    %v488 = vld [vmem:[#allocation7 + $0x358] sm:$0xff]
    %v489 = vld [vmem:[#allocation7 + $0x360] sm:$0xff]
    %v490 = vld [vmem:[#allocation7 + $0x368] sm:$0xff]
    %v491 = vld [vmem:[#allocation7 + $0x370] sm:$0xff]
    %v492 = vld [vmem:[#allocation7 + $0x378] sm:$0xff]
    %v493 = vld [vmem:[#allocation7 + $0x380] sm:$0xff]
    %v494 = vld [vmem:[#allocation7 + $0x388] sm:$0xff]
    %v495 = vld [vmem:[#allocation7 + $0x390] sm:$0xff]
    %v496 = vld [vmem:[#allocation7 + $0x398] sm:$0xff]
    %v497 = vld [vmem:[#allocation7 + $0x3a0] sm:$0xff]
    %v498 = vld [vmem:[#allocation7 + $0x3a8] sm:$0xff]
    %v499 = vld [vmem:[#allocation7 + $0x3b0] sm:$0xff]
    %v500 = vld [vmem:[#allocation7 + $0x3b8] sm:$0xff]
    %v501 = vld [vmem:[#allocation7 + $0x3c0] sm:$0xff]
    %v502 = vld [vmem:[#allocation7 + $0x3c8] sm:$0xff]
    %v503 = vld [vmem:[#allocation7 + $0x3d0] sm:$0xff]
    %v504 = vld [vmem:[#allocation7 + $0x3d8] sm:$0xff]
    %v505 = vld [vmem:[#allocation7 + $0x3e0] sm:$0xff]
    %v506 = vld [vmem:[#allocation7 + $0x3e8] sm:$0xff]
    %v507 = vld [vmem:[#allocation7 + $0x3f0] sm:$0xff]
    %v508 = vld [vmem:[#allocation7 + $0x3f8] sm:$0xff]
    %v509 = vld [vmem:[#allocation8] sm:$0xff]
    %v511 = vperm.slane %v509, 0
    %v512 = vperm.slane %v509, 1
    %v513 = vperm.slane %v509, 2
    %v514 = vperm.slane %v509, 3
    %v515 = vperm.slane %v509, 4
    %v516 = vperm.slane %v509, 5
    %v517 = vperm.slane %v509, 6
    %v518 = vperm.slane %v509, 7
    %527 = vmatpush.msra.mxu0 %v501
    %528 = vmatpush.msra.mxu0 %v493
    %529 = vmatpush.msra.mxu0 %v485
    %530 = vmatpush.msra.mxu0 %v477
    %531 = vmatpush.msra.mxu0 %v469
    %532 = vmatpush.msra.mxu0 %v461
    %533 = vmatpush.msra.mxu0 %v453
    %534 = vmatpush.msra.mxu0 %v445
    %535 = vmatpush.msra.mxu0 %v437
    %536 = vmatpush.msra.mxu0 %v429
    %537 = vmatpush.msra.mxu0 %v421
    %538 = vmatpush.msra.mxu0 %v413
    %539 = vmatpush.msra.mxu0 %v405
    %540 = vmatpush.msra.mxu0 %v397
    %541 = vmatpush.msra.mxu0 %v389
    %542 = vmatpush.msra.mxu0 %v381
    %543 = vmatmul.f32.gmra.mxu0 %v380
    %v544 = vpop.f32.mrf.mxu0
    %v545 = vadd.f32 %v511, %v544
    %546 = vdwg.mxu0
    %547 = vmatpush.msra.mxu0 %v502
    %548 = vmatpush.msra.mxu0 %v494
    %549 = vmatpush.msra.mxu0 %v486
    %550 = vmatpush.msra.mxu0 %v478
    %551 = vmatpush.msra.mxu0 %v470
    %552 = vmatpush.msra.mxu0 %v462
    %553 = vmatpush.msra.mxu0 %v454
    %554 = vmatpush.msra.mxu0 %v446
    %555 = vmatpush.msra.mxu0 %v438
    %556 = vmatpush.msra.mxu0 %v430
    %557 = vmatpush.msra.mxu0 %v422
    %558 = vmatpush.msra.mxu0 %v414
    %559 = vmatpush.msra.mxu0 %v406
    %560 = vmatpush.msra.mxu0 %v398
    %561 = vmatpush.msra.mxu0 %v390
    %562 = vmatpush.msra.mxu0 %v382
    %563 = vmatmul.f32.gmra.mxu0 %v380
    %v564 = vpop.f32.mrf.mxu0
    %v565 = vadd.f32 %v512, %v564
    %566 = vdwg.mxu0
    %567 = vmatpush.msra.mxu0 %v503
    %568 = vmatpush.msra.mxu0 %v495
    %569 = vmatpush.msra.mxu0 %v487
    %570 = vmatpush.msra.mxu0 %v479
    %571 = vmatpush.msra.mxu0 %v471
    %572 = vmatpush.msra.mxu0 %v463
    %573 = vmatpush.msra.mxu0 %v455
    %574 = vmatpush.msra.mxu0 %v447
    %575 = vmatpush.msra.mxu0 %v439
    %576 = vmatpush.msra.mxu0 %v431
    %577 = vmatpush.msra.mxu0 %v423
    %578 = vmatpush.msra.mxu0 %v415
    %579 = vmatpush.msra.mxu0 %v407
    %580 = vmatpush.msra.mxu0 %v399
    %581 = vmatpush.msra.mxu0 %v391
    %582 = vmatpush.msra.mxu0 %v383
    %583 = vmatmul.f32.gmra.mxu0 %v380
    %v584 = vpop.f32.mrf.mxu0
    %v585 = vadd.f32 %v513, %v584
    %586 = vdwg.mxu0
    %587 = vmatpush.msra.mxu0 %v504
    %588 = vmatpush.msra.mxu0 %v496
    %589 = vmatpush.msra.mxu0 %v488
    %590 = vmatpush.msra.mxu0 %v480
    %591 = vmatpush.msra.mxu0 %v472
    %592 = vmatpush.msra.mxu0 %v464
    %593 = vmatpush.msra.mxu0 %v456
    %594 = vmatpush.msra.mxu0 %v448
    %595 = vmatpush.msra.mxu0 %v440
    %596 = vmatpush.msra.mxu0 %v432
    %597 = vmatpush.msra.mxu0 %v424
    %598 = vmatpush.msra.mxu0 %v416
    %599 = vmatpush.msra.mxu0 %v408
    %600 = vmatpush.msra.mxu0 %v400
    %601 = vmatpush.msra.mxu0 %v392
    %602 = vmatpush.msra.mxu0 %v384
    %603 = vmatmul.f32.gmra.mxu0 %v380
    %v604 = vpop.f32.mrf.mxu0
    %v605 = vadd.f32 %v514, %v604
    %606 = vdwg.mxu0
    %607 = vmatpush.msra.mxu0 %v505
    %608 = vmatpush.msra.mxu0 %v497
    %609 = vmatpush.msra.mxu0 %v489
    %610 = vmatpush.msra.mxu0 %v481
    %611 = vmatpush.msra.mxu0 %v473
    %612 = vmatpush.msra.mxu0 %v465
    %613 = vmatpush.msra.mxu0 %v457
    %614 = vmatpush.msra.mxu0 %v449
    %615 = vmatpush.msra.mxu0 %v441
    %616 = vmatpush.msra.mxu0 %v433
    %617 = vmatpush.msra.mxu0 %v425
    %618 = vmatpush.msra.mxu0 %v417
    %619 = vmatpush.msra.mxu0 %v409
    %620 = vmatpush.msra.mxu0 %v401
    %621 = vmatpush.msra.mxu0 %v393
    %622 = vmatpush.msra.mxu0 %v385
    %623 = vmatmul.f32.gmra.mxu0 %v380
    %v624 = vpop.f32.mrf.mxu0
    %v625 = vadd.f32 %v515, %v624
    %626 = vdwg.mxu0
    %627 = vmatpush.msra.mxu0 %v506
    %628 = vmatpush.msra.mxu0 %v498
    %629 = vmatpush.msra.mxu0 %v490
    %630 = vmatpush.msra.mxu0 %v482
    %631 = vmatpush.msra.mxu0 %v474
    %632 = vmatpush.msra.mxu0 %v466
    %633 = vmatpush.msra.mxu0 %v458
    %634 = vmatpush.msra.mxu0 %v450
    %635 = vmatpush.msra.mxu0 %v442
    %636 = vmatpush.msra.mxu0 %v434
    %637 = vmatpush.msra.mxu0 %v426
    %638 = vmatpush.msra.mxu0 %v418
    %639 = vmatpush.msra.mxu0 %v410
    %640 = vmatpush.msra.mxu0 %v402
    %641 = vmatpush.msra.mxu0 %v394
    %642 = vmatpush.msra.mxu0 %v386
    %643 = vmatmul.f32.gmra.mxu0 %v380
    %v644 = vpop.f32.mrf.mxu0
    %v645 = vadd.f32 %v516, %v644
    %646 = vdwg.mxu0
    %647 = vmatpush.msra.mxu0 %v507
    %648 = vmatpush.msra.mxu0 %v499
    %649 = vmatpush.msra.mxu0 %v491
    %650 = vmatpush.msra.mxu0 %v483
    %651 = vmatpush.msra.mxu0 %v475
    %652 = vmatpush.msra.mxu0 %v467
    %653 = vmatpush.msra.mxu0 %v459
    %654 = vmatpush.msra.mxu0 %v451
    %655 = vmatpush.msra.mxu0 %v443
    %656 = vmatpush.msra.mxu0 %v435
    %657 = vmatpush.msra.mxu0 %v427
    %658 = vmatpush.msra.mxu0 %v419
    %659 = vmatpush.msra.mxu0 %v411
    %660 = vmatpush.msra.mxu0 %v403
    %661 = vmatpush.msra.mxu0 %v395
    %662 = vmatpush.msra.mxu0 %v387
    %663 = vmatmul.f32.gmra.mxu0 %v380
    %v664 = vpop.f32.mrf.mxu0
    %v665 = vadd.f32 %v517, %v664
    %666 = vdwg.mxu0
    %667 = vmatpush.msra.mxu0 %v508
    %668 = vmatpush.msra.mxu0 %v500
    %669 = vmatpush.msra.mxu0 %v492
    %670 = vmatpush.msra.mxu0 %v484
    %671 = vmatpush.msra.mxu0 %v476
    %672 = vmatpush.msra.mxu0 %v468
    %673 = vmatpush.msra.mxu0 %v460
    %674 = vmatpush.msra.mxu0 %v452
    %675 = vmatpush.msra.mxu0 %v444
    %676 = vmatpush.msra.mxu0 %v436
    %677 = vmatpush.msra.mxu0 %v428
    %678 = vmatpush.msra.mxu0 %v420
    %679 = vmatpush.msra.mxu0 %v412
    %680 = vmatpush.msra.mxu0 %v404
    %681 = vmatpush.msra.mxu0 %v396
    %682 = vmatpush.msra.mxu0 %v388
    %683 = vmatmul.f32.gmra.mxu0 %v380
    %v684 = vpop.f32.mrf.mxu0
    %v685 = vadd.f32 %v518, %v684
    %686 = vdwg.mxu0
    %687 = vst [vmem:[#allocation10] sm:$0xff] %v545
    %688 = vst [vmem:[#allocation10 + $0x8] sm:$0xff] %v565
    %689 = vst [vmem:[#allocation10 + $0x10] sm:$0xff] %v585
    %690 = vst [vmem:[#allocation10 + $0x18] sm:$0xff] %v605
    %691 = vst [vmem:[#allocation10 + $0x20] sm:$0xff] %v625
    %692 = vst [vmem:[#allocation10 + $0x28] sm:$0xff] %v645
    %693 = vst [vmem:[#allocation10 + $0x30] sm:$0xff] %v665
    %694 = vst [vmem:[#allocation10 + $0x38] sm:$0xff] %v685
    // Predicated region
    $region38: #{tpu_custom_call.1} parent=1 // pred_check
      _
    $region39: #{tpu_custom_call.1} parent=1 // pred_check_branch
      %696 = sbr.rel (0) target = $region41
    $region40: #{tpu_custom_call.1} parent=1 // pred_region
      %698 = vsyncadd [#allocation4], 0
      %s700 = sshll.u32 [#allocation10], 4
      %s701 = int_to_ptr.vmem [resolvable:$true] %s700
      %s702 = sshll.u32 %s5, 4
      %s703 = int_to_ptr.hbm [resolvable:$true] %s702
      %705 = dma.vmem_to_hbm [thread:$0]  %s701, 1024, %s703, [#allocation4]
    $region41: #{tpu_custom_call.1} parent=1 // pred_fallthru
      _
    // Predicated region
    $region42: #{tpu_custom_call.1} parent=1 // pred_check
      _
    $region43: #{tpu_custom_call.1} parent=1 // pred_check_branch
      %707 = sbr.rel (0) target = $region45
    $region44: #{tpu_custom_call.1} parent=1 // pred_region
      %709 = dma.done [#allocation4], 1024
    $region45: #{tpu_custom_call.1} parent=1 // pred_fallthru
      _
    %710 = vsyncpa [#allocation3], 1
    %711 = vsyncpa [#allocation6], 1
    %712 = vsyncpa [#allocation9], 1
    %713 = vsyncpa [#allocation4], 1

</llo_original>
